<compile_context>
chip_gen: v6e
topology: v6e:2x2x1
jax: 0.10.0
libtpu: 0.0.40
codegen_flags: <defaults>
</compile_context>

<pallas_src>
import functools

import jax
import jax.numpy as jnp
from jax.experimental import pallas as pl
from jax.experimental.pallas import tpu as pltpu


def _round_up(x, m):
    return ((x + m - 1) // m) * m


def _embedding_kernel(ids_ref, wbd_ref, out_ref, *, group):
    # ids_ref: (rows_tile, group) int32   -- per-row packed indices, already
    #                                        offset by p*K for lane-block p.
    # wbd_ref: (group*K, group*D)          -- block-diagonal replicated codebook
    #                                        (VMEM resident across the grid).
    # out_ref: (rows_tile, group*D)        -- lane-dense gathered embeddings.
    rows = ids_ref.shape[0]
    pk = wbd_ref.shape[0]

    col = jax.lax.broadcasted_iota(jnp.int32, (rows, pk), 1)
    hit = None
    for p in range(group):  # small static unroll (group == 128 // D <= 16)
        m = col == ids_ref[:, p:p + 1]          # (rows, pk) bool
        hit = m if hit is None else jnp.logical_or(hit, m)

    onehot = hit.astype(wbd_ref.dtype)          # exact 0/1 in codebook dtype
    out_ref[...] = jnp.dot(
        onehot, wbd_ref[...], preferred_element_type=jnp.float32
    ).astype(out_ref.dtype)


@functools.partial(jax.jit, static_argnames=("tile_n",))
def _embedding_lookup_pallas(embed_id_flat, weight, *, tile_n=1024):
    """embed_id_flat: (N,) integer ; weight: (K, D) -> (N, D) in weight.dtype."""
    n = embed_id_flat.shape[0]
    k, d = weight.shape
    elt = jnp.dtype(weight.dtype).itemsize

    # Pack `group` tokens per output row so the kernel output last dim is a
    # lane-dense multiple of 128 (avoids masked partial stores when D < 128).
    group = 128 // d if (d < 128 and 128 % d == 0) else 1
    # Cap so the replicated block-diag codebook stays small in VMEM.
    while group > 1 and (group * k) * (group * d) * elt > 8 * 2**20:
        group //= 2

    # Effective tile: large for MXU-M fill, but do not over-pad tiny inputs.
    align = 8 * group
    tile = _round_up(min(tile_n, _round_up(n, align)), align)
    n_pad = _round_up(n, tile)
    rows_tile = tile // group
    rows_total = n_pad // group
    grid = n_pad // tile

    # Clamp (matches jnp.take semantics / avoids silent all-zero rows), pad,
    # group, and pre-offset each lane-block position p by p*K so the kernel's
    # one-hot compare needs no extra arithmetic.
    ids = jnp.clip(embed_id_flat.astype(jnp.int32), 0, k - 1)
    ids = jnp.pad(ids, (0, n_pad - n))
    ids_grouped = ids.reshape(rows_total, group)
    if group > 1:
        ids_grouped = ids_grouped + jnp.arange(group, dtype=jnp.int32) * k

    if group == 1:
        wbd = weight
    else:
        eye = jnp.eye(group, dtype=weight.dtype)
        # wbd[p*K + j, q*D + dd] = eye[p, q] * W[j, dd]
        wbd = (eye[:, None, :, None] * weight[None, :, None, :]
               ).reshape(group * k, group * d)
    pk, pd = wbd.shape

    flops = 2 * rows_total * pk * pd
    bytes_accessed = n_pad * 4 + pk * pd * elt + rows_total * pd * elt
    # VMEM budget: resident codebook + double-buffered ids/out + one-hot temp.
    vmem_est = (2 * pk * pd * elt
                + 2 * rows_tile * 128 * 4
                + 2 * rows_tile * max(pd, 128) * elt
                + 2 * rows_tile * pk * 4)
    vmem_limit = int(min(64 * 2**20, max(32 * 2**20, int(vmem_est * 1.5))))

    kernel = functools.partial(_embedding_kernel, group=group)

    out = pl.pallas_call(
        kernel,
        out_shape=jax.ShapeDtypeStruct((rows_total, pd), weight.dtype),
        grid_spec=pltpu.PrefetchScalarGridSpec(
            num_scalar_prefetch=0,
            grid=(grid,),
            in_specs=[
                pl.BlockSpec((rows_tile, group), lambda i: (i, 0)),
                # grid-invariant block index -> codebook stays VMEM-resident
                pl.BlockSpec((pk, pd), lambda i: (0, 0)),
            ],
            out_specs=pl.BlockSpec((rows_tile, pd), lambda i: (i, 0)),
        ),
        compiler_params=pltpu.CompilerParams(
            dimension_semantics=("parallel",),
            vmem_limit_bytes=vmem_limit,
        ),
        cost_estimate=pl.CostEstimate(
            flops=flops, transcendentals=0, bytes_accessed=bytes_accessed),
    )(ids_grouped, wbd)

    # (rows_total, group*D) -> (n_pad, D) -> (N, D)
    return out.reshape(n_pad, d)[:n]


def _embedding_lookup(embed_id_flat, weight, *, tile_n=1024):
    k, d = weight.shape
    elt = jnp.dtype(weight.dtype).itemsize
    # If even the un-replicated codebook blows a conservative VMEM budget, fall
    # back to plain XLA gather.
    # TODO(synk): K-tiled accumulator kernel (or DMA row-gather) for huge codebooks.
    if k * d * elt > 24 * 2**20:
        return jnp.take(weight, jnp.clip(embed_id_flat, 0, k - 1), axis=0)
    return _embedding_lookup_pallas(embed_id_flat, weight, tile_n=tile_n)


class EmbeddingEMA:
    """JAX / Pallas port of ldm.modules.vqvae.quantize_ori.EmbeddingEMA.

    Buffers + forward; EMA update helpers are plain-JAX elementwise ops
    (outside the forward hot path).
    """

    def __init__(self, num_tokens, codebook_dim, decay=0.99, eps=1e-5, key=None):
        self.decay = decay
        self.eps = eps
        self.num_tokens = num_tokens
        self.codebook_dim = codebook_dim
        if key is None:
            key = jax.random.PRNGKey(0)
        weight = jax.random.normal(key, (num_tokens, codebook_dim), jnp.float32)
        # Kept in f32 for bit-exact F.embedding semantics; a bf16 codebook would
        # use the full-rate v6e/v7x MXU path at the cost of bf16 rounding.
        self.weight = weight
        self.cluster_size = jnp.zeros((num_tokens,), jnp.float32)
        self.embed_avg = weight.copy()
        self.update = True

    def forward(self, embed_id, *, tile_n=1024):
        # embed_id: integer tensor of arbitrary shape (e.g. (B, H, W)).
        # returns embed_id.shape + (codebook_dim,) in self.weight.dtype.
        orig_shape = embed_id.shape
        flat = embed_id.reshape(-1)
        out = _embedding_lookup(flat, self.weight, tile_n=tile_n)
        return out.reshape(*orig_shape, self.codebook_dim)

    __call__ = forward

    # --- EMA bookkeeping (not part of forward; plain JAX elementwise) ---
    def cluster_size_ema_update(self, new_cluster_size):
        self.cluster_size = (
            self.cluster_size * self.decay + new_cluster_size * (1.0 - self.decay)
        )

    def embed_avg_ema_update(self, new_embed_avg):
        self.embed_avg = (
            self.embed_avg * self.decay + new_embed_avg * (1.0 - self.decay)
        )

    def weight_update(self, num_tokens):
        n = self.cluster_size.sum()
        smoothed = (self.cluster_size + self.eps) / (n + num_tokens * self.eps) * n
        self.weight = self.embed_avg / smoothed[:, None]


if __name__ == "__main__":
    num_tokens = 512      # codebook size
    codebook_dim = 64     # embedding dim (< 128 -> exercises lane-dense packing)
    B, H, W = 2, 16, 16   # embed_id shape -> N = 512 flattened indices

    key = jax.random.PRNGKey(0)
    k_w, k_id, k_id2 = jax.random.split(key, 3)

    module = EmbeddingEMA(num_tokens, codebook_dim, key=k_w)

    # Main check: grid of 2 parallel steps at this demo size (tile_n=256).
    embed_id = jax.random.randint(k_id, (B, H, W), 0, num_tokens, dtype=jnp.int32)
    out = module(embed_id, tile_n=256)
    out = jax.block_until_ready(out)

    ref = jnp.take(module.weight, embed_id, axis=0)
    assert out.shape == (B, H, W, codebook_dim), out.shape
    assert out.dtype == module.weight.dtype
    assert jnp.allclose(out, ref, atol=1e-6, rtol=1e-6)

    # Secondary check: ragged N (exercises padding + final slice) incl. edge ids.
    embed_id2 = jax.random.randint(k_id2, (1, 7, 11), 0, num_tokens, dtype=jnp.int32)
    embed_id2 = embed_id2.at[0, 0, 0].set(0).at[0, 6, 10].set(num_tokens - 1)
    out2 = jax.block_until_ready(module(embed_id2))
    ref2 = jnp.take(module.weight, embed_id2, axis=0)
    assert out2.shape == (1, 7, 11, codebook_dim), out2.shape
    assert jnp.allclose(out2, ref2, atol=1e-6, rtol=1e-6)

    print("KERNEL_OK")
</pallas_src>

<mosaic_0001>
module attributes {stable_mosaic.version = 11 : i64} {
  func.func @_embedding_kernel(%arg0: i32, %arg1: memref<128x2xi32, #tpu.memory_space<vmem>>, %arg2: memref<1024x128xf32, #tpu.memory_space<vmem>>, %arg3: memref<128x128xf32, #tpu.memory_space<vmem>>) attributes {dimension_semantics = [#tpu.dimension_semantics<parallel>], iteration_bounds = array<i64: 2>, scalar_prefetch = 0 : i64, scratch_operands = 0 : i64, tpu.core_type = #tpu.core_type<tc>, window_params = [{transform_indices = @transform_0, window_bounds = array<i64: 128, 2>}, {pipeline_mode = #tpu.pipeline_mode<synchronous>, transform_indices = @transform_1, window_bounds = array<i64: 1024, 128>}, {transform_indices = @transform_2, window_bounds = array<i64: 128, 128>}]} {
    %0 = tpu.iota {dimensions = array<i32: 1>} : vector<128x1024xi32>
    %c0 = arith.constant 0 : index
    %c0_0 = arith.constant 0 : index
    %1 = vector.load %arg1[%c0, %c0_0] : memref<128x2xi32, #tpu.memory_space<vmem>>, vector<128x1xi32>
    %2 = vector.broadcast %1 : vector<128x1xi32> to vector<128x1024xi32>
    %3 = arith.cmpi eq, %0, %2 : vector<128x1024xi32>
    %c0_1 = arith.constant 0 : index
    %c1 = arith.constant 1 : index
    %4 = vector.load %arg1[%c0_1, %c1] : memref<128x2xi32, #tpu.memory_space<vmem>>, vector<128x1xi32>
    %5 = vector.broadcast %4 : vector<128x1xi32> to vector<128x1024xi32>
    %6 = arith.cmpi eq, %0, %5 : vector<128x1024xi32>
    %7 = arith.ori %3, %6 : vector<128x1024xi1>
    %8 = arith.extui %7 : vector<128x1024xi1> to vector<128x1024xi32>
    %9 = arith.sitofp %8 : vector<128x1024xi32> to vector<128x1024xf32>
    %c0_2 = arith.constant 0 : index
    %c0_3 = arith.constant 0 : index
    %10 = vector.load %arg2[%c0_2, %c0_3] : memref<1024x128xf32, #tpu.memory_space<vmem>>, vector<1024x128xf32>
    %cst = arith.constant dense<0.000000e+00> : vector<128x128xf32>
    %11 = tpu.matmul %9, %10, %cst {dimension_numbers = #tpu.dot_dimension_numbers<[1], [0], [0], [1], [0, 0, 1, 1], [], []>} : vector<128x1024xf32>, vector<1024x128xf32>, vector<128x128xf32> -> vector<128x128xf32>
    %c0_4 = arith.constant 0 : index
    %c0_5 = arith.constant 0 : index
    %12 = vector.load %arg3[%c0_4, %c0_5] : memref<128x128xf32, #tpu.memory_space<vmem>>, vector<128x128xf32>
    tpu.vector_store %arg3[%c0_4, %c0_5], %11 {strides = array<i32>} : memref<128x128xf32, #tpu.memory_space<vmem>>, vector<128x128xf32>,
    return
  }
  func.func @transform_0(%arg0: i32) -> (i32, i32) {
    %c0_i32 = arith.constant 0 : i32
    %c0_i32_0 = arith.constant 0 : i32
    return %arg0, %c0_i32 : i32, i32
  }
  func.func @transform_1(%arg0: i32) -> (i32, i32) {
    %c0_i32 = arith.constant 0 : i32
    %c0_i32_0 = arith.constant 0 : i32
    %c0_i32_1 = arith.constant 0 : i32
    return %c0_i32, %c0_i32_0 : i32, i32
  }
  func.func @transform_2(%arg0: i32) -> (i32, i32) {
    %c0_i32 = arith.constant 0 : i32
    %c0_i32_0 = arith.constant 0 : i32
    return %arg0, %c0_i32 : i32, i32
  }
}

</mosaic_0001>

<llo_original>
// kernel: _embedding_lookup_pallas.1
$region0: #{_embedding_lookup_pallas.1}
  #allocation0 [shape = 'u32[]', space=smem, size = 0x4, offset = 0x4, fixed_abs, tag = 'smem constant byte address 0x4 - core index']
  #allocation1 [shape = 'u32[144,128]{1,0:T(1,128)}', space=vmem, size = 0x12000, scoped, tag = 'internal scratch']
  %s0 = inlined_call_operand.vmem [shape: s32[256,2], index: 0, kind: input, shape index: {}]
  %s1 = inlined_call_operand.vmem [shape: f32[1024,128], index: 1, kind: input, shape index: {}]
  %s2 = inlined_call_operand.vmem [shape: f32[256,128], index: 2, kind: output, shape index: {}]
  %s3 = sld [smem:[#allocation0]]
  $region41: #{_embedding_lookup_pallas.1} parent=0
    _
  %s5 = ssub.s32 1, %s3
  %s6 = scalar_select 0, %s5, %s3
  loop: start=0, step=1, limit=4
  $region2: #{_embedding_lookup_pallas.1} parent=0 // loop_pre_header
    _
  $region3: #{_embedding_lookup_pallas.1} parent=0 // loop_header
    %s8 = sphi 0, %s12
    %p9 = scmp.ge.s32.totalorder %s8, 4
    %s18 = sphi 0, %s20
    %s21 = sphi 0, %s18
    %s22 = sphi 0, %s21
    %s38 = sphi 0, %s22
    %s42 = sphi 0, %s42
    %s44 = sphi 0, %s42
    %s45 = sphi 0, %s44
    %s59 = sphi 0, %s45
    %s65 = sphi 0, %s67
    %s68 = sphi 0, %s65
    %s69 = sphi 0, %s68
    %s85 = sphi 0, %s69
  $region4: #{_embedding_lookup_pallas.1} parent=0 // loop_header_branch
    %11 = sbr.rel (%p9) target = $region8
  $region5: #{_embedding_lookup_pallas.1} parent=0 // loop_body
    %s13 = ssub.s32 %s8, 1
    %s14 = ssub.s32 %s8, 2
    %s15 = sadd.s32 %s8, 1
    %s16 = ssub.s32 %s8, %s15
    %p17 = scmp.eq.s32.totalorder %s16, 0
    %s19 = sadd.s32 %s18, 1
    %s20 = scalar_select %p17, %s18, %s19
    %p23 = pneg %p17
    %p24 = scmp.eq.s32.totalorder %s8, 1
    %p25 = por %p23, %p24
    %p26 = scmp.ne.s32.totalorder %s18, %s21
    %p27 = scmp.eq.s32.totalorder %s8, 0
    %p28 = por %p26, %p27
    %p29 = scmp.ne.s32.totalorder %s18, %s21
    %p30 = scmp.eq.s32.totalorder %s13, 1
    %p31 = por %p29, %p30
    %p32 = scmp.ne.s32.totalorder %s21, %s22
    %p33 = scmp.eq.s32.totalorder %s13, 0
    %p34 = por %p32, %p33
    %p35 = scmp.ne.s32.totalorder %s21, %s22
    %p36 = scmp.eq.s32.totalorder %s14, 1
    %p37 = por %p35, %p36
    %p39 = scmp.ne.s32.totalorder %s22, %s38
    %p40 = scmp.eq.s32.totalorder %s14, 0
    %p41 = por %p39, %p40
    %s43 = sadd.s32 %s42, 1
    %p46 = scmp.eq.s32.totalorder %s8, 1
    %p47 = scmp.ne.s32.totalorder %s42, %s44
    %p48 = scmp.eq.s32.totalorder %s8, 0
    %p49 = por %p47, %p48
    %p50 = scmp.ne.s32.totalorder %s42, %s44
    %p51 = scmp.eq.s32.totalorder %s13, 1
    %p52 = por %p50, %p51
    %p53 = scmp.ne.s32.totalorder %s44, %s45
    %p54 = scmp.eq.s32.totalorder %s13, 0
    %p55 = por %p53, %p54
    %p56 = scmp.ne.s32.totalorder %s44, %s45
    %p57 = scmp.eq.s32.totalorder %s14, 1
    %p58 = por %p56, %p57
    %p60 = scmp.ne.s32.totalorder %s45, %s59
    %p61 = scmp.eq.s32.totalorder %s14, 0
    %p62 = por %p60, %p61
    %s63 = ssub.s32 %s8, %s15
    %p64 = scmp.eq.s32.totalorder %s63, 0
    %s66 = sadd.s32 %s65, 1
    %s67 = scalar_select %p64, %s65, %s66
    %p70 = pneg %p64
    %p71 = scmp.eq.s32.totalorder %s8, 1
    %p72 = por %p70, %p71
    %p73 = scmp.ne.s32.totalorder %s65, %s68
    %p74 = scmp.eq.s32.totalorder %s8, 0
    %p75 = por %p73, %p74
    %p76 = scmp.ne.s32.totalorder %s65, %s68
    %p77 = scmp.eq.s32.totalorder %s13, 1
    %p78 = por %p76, %p77
    %p79 = scmp.ne.s32.totalorder %s68, %s69
    %p80 = scmp.eq.s32.totalorder %s13, 0
    %p81 = por %p79, %p80
    %p82 = scmp.ne.s32.totalorder %s68, %s69
    %p83 = scmp.eq.s32.totalorder %s14, 1
    %p84 = por %p82, %p83
    %p86 = scmp.ne.s32.totalorder %s69, %s85
    %p87 = scmp.eq.s32.totalorder %s14, 0
    %p88 = por %p86, %p87
    %p89 = scmp.le.s32.totalorder 1, %s8
    %p90 = scmp.lt.s32.totalorder %s8, 3
    %p91 = pnand %p89, %p90
    %p92 = pneg %p91
    // Predicated region
    $region9: #{_embedding_lookup_pallas.1} parent=5 // pred_check
      _
    $region10: #{_embedding_lookup_pallas.1} parent=5 // pred_check_branch
      %94 = sbr.rel (%p91) target = $region12
    $region11: #{_embedding_lookup_pallas.1} parent=5 // pred_region
      %s95 = ssub.s32 %s8, 1
      // Predicated region
      $region13: #{_embedding_lookup_pallas.1} parent=11 // pred_check
        %p96 = pneg %p55
      $region14: #{_embedding_lookup_pallas.1} parent=11 // pred_check_branch
        %98 = sbr.rel (%p96) target = $region16
      $region15: #{_embedding_lookup_pallas.1} parent=11 // pred_region
        _
      $region16: #{_embedding_lookup_pallas.1} parent=11 // pred_fallthru
        _
    $region12: #{_embedding_lookup_pallas.1} parent=5 // pred_fallthru
      _
    %p99 = scmp.lt.s32.totalorder %s8, 2
    // Predicated region
    $region17: #{_embedding_lookup_pallas.1} parent=5 // pred_check
      %p100 = pneg %p99
    $region18: #{_embedding_lookup_pallas.1} parent=5 // pred_check_branch
      %102 = sbr.rel (%p100) target = $region20
    $region19: #{_embedding_lookup_pallas.1} parent=5 // pred_region
      // Predicated region
      $region21: #{_embedding_lookup_pallas.1} parent=19 // pred_check
        %p103 = pneg %p28
      $region22: #{_embedding_lookup_pallas.1} parent=19 // pred_check_branch
        %105 = sbr.rel (%p103) target = $region24
      $region23: #{_embedding_lookup_pallas.1} parent=19 // pred_region
        %s106 = smul.u32 16, %s8
        %p107 = scmp.lt.s32.totalorder %s106, 31
        %s108 = scalar_select %p107, %s106, 31
        %s109 = smul.addr %s108, 8
        %s110 = scalar_lea.vmem %s0, %s109
        %s111 = smul.u32 16, %s8
      $region24: #{_embedding_lookup_pallas.1} parent=19 // pred_fallthru
        _
    $region20: #{_embedding_lookup_pallas.1} parent=5 // pred_fallthru
      _
    %p112 = scmp.le.s32.totalorder 1, %s8
    %p113 = scmp.lt.s32.totalorder %s8, 3
    %p114 = pnand %p112, %p113
    %p115 = pneg %p114
    // Predicated region
    $region25: #{_embedding_lookup_pallas.1} parent=5 // pred_check
      _
    $region26: #{_embedding_lookup_pallas.1} parent=5 // pred_check_branch
      %117 = sbr.rel (%p114) target = $region28
    $region27: #{_embedding_lookup_pallas.1} parent=5 // pred_region
      %s118 = ssub.s32 %s8, 1
      %s119 = smul.u32 16, %s13
      %p120 = scmp.lt.s32.totalorder %s119, 31
      %s121 = scalar_select %p120, %s119, 31
      %s122 = smul.addr %s121, 8
      %s123 = scalar_lea.vmem %s0, %s122
      %p124 = pneg %p34
      %p125 = pneg %p31
      %p126 = pneg %p55
      %p127 = pneg %p52
      %p128 = pneg %p81
      %p129 = pneg %p78
      %s130 = smul.u32 16, %s13
      %p131 = scmp.lt.s32.totalorder %s130, 31
      %s132 = scalar_select %p131, %s130, 31
      %s133 = smul.addr %s132, 8
      %s134 = scalar_lea.vmem %s2, %s133
      %s135 = smul.u32 16, %s13
      %p136 = scmp.lt.s32.totalorder %s135, 31
      %s137 = scalar_select %p136, %s135, 31
      %s138 = smul.addr %s137, 8
      %s139 = scalar_lea.vmem %s0, %s138
      %s140 = smul.u32 16, %s13
      %s141 = smul.u32 16, %s13
      %p142 = scmp.lt.s32.totalorder %s141, 31
      %s143 = scalar_select %p142, %s141, 31
      %s144 = smul.addr %s143, 8
      %s145 = scalar_lea.vmem %s2, %s144
      %s146 = smul.u32 16, %s13
      %v147 = vlaneseq
      %v148 = vand.u32 %v147, 127
      %v149 = vadd.s32 %v148, 128
      %v150 = vadd.s32 %v148, 256
      %v151 = vadd.s32 %v148, 384
      %v152 = vadd.s32 %v148, 512
      %v153 = vadd.s32 %v148, 640
      %v154 = vadd.s32 %v148, 768
      %v155 = vadd.s32 %v148, 896
      %v156 = vld [vmem:[%s139] sm:$0xff]
      %v157 = vld [vmem:[%s139 + $0x8] sm:$0xff]
      %v158 = vld [vmem:[%s139 + $0x10] sm:$0xff]
      %v159 = vld [vmem:[%s139 + $0x18] sm:$0xff]
      %v160 = vld [vmem:[%s139 + $0x20] sm:$0xff]
      %v161 = vld [vmem:[%s139 + $0x28] sm:$0xff]
      %v162 = vld [vmem:[%s139 + $0x30] sm:$0xff]
      %v163 = vld [vmem:[%s139 + $0x38] sm:$0xff]
      %v164 = vld [vmem:[%s139 + $0x40] sm:$0xff]
      %v165 = vld [vmem:[%s139 + $0x48] sm:$0xff]
      %v166 = vld [vmem:[%s139 + $0x50] sm:$0xff]
      %v167 = vld [vmem:[%s139 + $0x58] sm:$0xff]
      %v168 = vld [vmem:[%s139 + $0x60] sm:$0xff]
      %v169 = vld [vmem:[%s139 + $0x68] sm:$0xff]
      %v170 = vld [vmem:[%s139 + $0x70] sm:$0xff]
      %v171 = vld [vmem:[%s139 + $0x78] sm:$0xff]
      %172 = vset.pattern.permute.xlu0 0
      %173 = vperm.xlu0 %172, %v156
      %v174 = vpop.permute.xlu0 %173
      %175 = vset.pattern.permute.xlu0 0
      %176 = vperm.xlu0 %175, %v157
      %v177 = vpop.permute.xlu0 %176
      %178 = vset.pattern.permute.xlu0 0
      %179 = vperm.xlu0 %178, %v158
      %v180 = vpop.permute.xlu0 %179
      %181 = vset.pattern.permute.xlu0 0
      %182 = vperm.xlu0 %181, %v159
      %v183 = vpop.permute.xlu0 %182
      %184 = vset.pattern.permute.xlu0 0
      %185 = vperm.xlu0 %184, %v160
      %v186 = vpop.permute.xlu0 %185
      %187 = vset.pattern.permute.xlu0 0
      %188 = vperm.xlu0 %187, %v161
      %v189 = vpop.permute.xlu0 %188
      %190 = vset.pattern.permute.xlu0 0
      %191 = vperm.xlu0 %190, %v162
      %v192 = vpop.permute.xlu0 %191
      %193 = vset.pattern.permute.xlu0 0
      %194 = vperm.xlu0 %193, %v163
      %v195 = vpop.permute.xlu0 %194
      %196 = vset.pattern.permute.xlu0 0
      %197 = vperm.xlu0 %196, %v164
      %v198 = vpop.permute.xlu0 %197
      %199 = vset.pattern.permute.xlu0 0
      %200 = vperm.xlu0 %199, %v165
      %v201 = vpop.permute.xlu0 %200
      %202 = vset.pattern.permute.xlu0 0
      %203 = vperm.xlu0 %202, %v166
      %v204 = vpop.permute.xlu0 %203
      %205 = vset.pattern.permute.xlu0 0
      %206 = vperm.xlu0 %205, %v167
      %v207 = vpop.permute.xlu0 %206
      %208 = vset.pattern.permute.xlu0 0
      %209 = vperm.xlu0 %208, %v168
      %v210 = vpop.permute.xlu0 %209
      %211 = vset.pattern.permute.xlu0 0
      %212 = vperm.xlu0 %211, %v169
      %v213 = vpop.permute.xlu0 %212
      %214 = vset.pattern.permute.xlu0 0
      %215 = vperm.xlu0 %214, %v170
      %v216 = vpop.permute.xlu0 %215
      %217 = vset.pattern.permute.xlu0 0
      %218 = vperm.xlu0 %217, %v171
      %v219 = vpop.permute.xlu0 %218
      %vm220 = vcmp.eq.s32.totalorder %v148, %v174
      %vm221 = vcmp.eq.s32.totalorder %v149, %v174
      %vm222 = vcmp.eq.s32.totalorder %v150, %v174
      %vm223 = vcmp.eq.s32.totalorder %v151, %v174
      %vm224 = vcmp.eq.s32.totalorder %v152, %v174
      %vm225 = vcmp.eq.s32.totalorder %v153, %v174
      %vm226 = vcmp.eq.s32.totalorder %v154, %v174
      %vm227 = vcmp.eq.s32.totalorder %v155, %v174
      %vm228 = vcmp.eq.s32.totalorder %v148, %v177
      %vm229 = vcmp.eq.s32.totalorder %v149, %v177
      %vm230 = vcmp.eq.s32.totalorder %v150, %v177
      %vm231 = vcmp.eq.s32.totalorder %v151, %v177
      %vm232 = vcmp.eq.s32.totalorder %v152, %v177
      %vm233 = vcmp.eq.s32.totalorder %v153, %v177
      %vm234 = vcmp.eq.s32.totalorder %v154, %v177
      %vm235 = vcmp.eq.s32.totalorder %v155, %v177
      %vm236 = vcmp.eq.s32.totalorder %v148, %v180
      %vm237 = vcmp.eq.s32.totalorder %v149, %v180
      %vm238 = vcmp.eq.s32.totalorder %v150, %v180
      %vm239 = vcmp.eq.s32.totalorder %v151, %v180
      %vm240 = vcmp.eq.s32.totalorder %v152, %v180
      %vm241 = vcmp.eq.s32.totalorder %v153, %v180
      %vm242 = vcmp.eq.s32.totalorder %v154, %v180
      %vm243 = vcmp.eq.s32.totalorder %v155, %v180
      %vm244 = vcmp.eq.s32.totalorder %v148, %v183
      %vm245 = vcmp.eq.s32.totalorder %v149, %v183
      %vm246 = vcmp.eq.s32.totalorder %v150, %v183
      %vm247 = vcmp.eq.s32.totalorder %v151, %v183
      %vm248 = vcmp.eq.s32.totalorder %v152, %v183
      %vm249 = vcmp.eq.s32.totalorder %v153, %v183
      %vm250 = vcmp.eq.s32.totalorder %v154, %v183
      %vm251 = vcmp.eq.s32.totalorder %v155, %v183
      %vm252 = vcmp.eq.s32.totalorder %v148, %v186
      %vm253 = vcmp.eq.s32.totalorder %v149, %v186
      %vm254 = vcmp.eq.s32.totalorder %v150, %v186
      %vm255 = vcmp.eq.s32.totalorder %v151, %v186
      %vm256 = vcmp.eq.s32.totalorder %v152, %v186
      %vm257 = vcmp.eq.s32.totalorder %v153, %v186
      %vm258 = vcmp.eq.s32.totalorder %v154, %v186
      %vm259 = vcmp.eq.s32.totalorder %v155, %v186
      %vm260 = vcmp.eq.s32.totalorder %v148, %v189
      %vm261 = vcmp.eq.s32.totalorder %v149, %v189
      %vm262 = vcmp.eq.s32.totalorder %v150, %v189
      %vm263 = vcmp.eq.s32.totalorder %v151, %v189
      %vm264 = vcmp.eq.s32.totalorder %v152, %v189
      %vm265 = vcmp.eq.s32.totalorder %v153, %v189
      %vm266 = vcmp.eq.s32.totalorder %v154, %v189
      %vm267 = vcmp.eq.s32.totalorder %v155, %v189
      %vm268 = vcmp.eq.s32.totalorder %v148, %v192
      %vm269 = vcmp.eq.s32.totalorder %v149, %v192
      %vm270 = vcmp.eq.s32.totalorder %v150, %v192
      %vm271 = vcmp.eq.s32.totalorder %v151, %v192
      %vm272 = vcmp.eq.s32.totalorder %v152, %v192
      %vm273 = vcmp.eq.s32.totalorder %v153, %v192
      %vm274 = vcmp.eq.s32.totalorder %v154, %v192
      %vm275 = vcmp.eq.s32.totalorder %v155, %v192
      %vm276 = vcmp.eq.s32.totalorder %v148, %v195
      %vm277 = vcmp.eq.s32.totalorder %v149, %v195
      %vm278 = vcmp.eq.s32.totalorder %v150, %v195
      %vm279 = vcmp.eq.s32.totalorder %v151, %v195
      %vm280 = vcmp.eq.s32.totalorder %v152, %v195
      %vm281 = vcmp.eq.s32.totalorder %v153, %v195
      %vm282 = vcmp.eq.s32.totalorder %v154, %v195
      %vm283 = vcmp.eq.s32.totalorder %v155, %v195
      %vm284 = vcmp.eq.s32.totalorder %v148, %v198
      %vm285 = vcmp.eq.s32.totalorder %v149, %v198
      %vm286 = vcmp.eq.s32.totalorder %v150, %v198
      %vm287 = vcmp.eq.s32.totalorder %v151, %v198
      %vm288 = vcmp.eq.s32.totalorder %v152, %v198
      %vm289 = vcmp.eq.s32.totalorder %v153, %v198
      %vm290 = vcmp.eq.s32.totalorder %v154, %v198
      %vm291 = vcmp.eq.s32.totalorder %v155, %v198
      %vm292 = vcmp.eq.s32.totalorder %v148, %v201
      %vm293 = vcmp.eq.s32.totalorder %v149, %v201
      %vm294 = vcmp.eq.s32.totalorder %v150, %v201
      %vm295 = vcmp.eq.s32.totalorder %v151, %v201
      %vm296 = vcmp.eq.s32.totalorder %v152, %v201
      %vm297 = vcmp.eq.s32.totalorder %v153, %v201
      %vm298 = vcmp.eq.s32.totalorder %v154, %v201
      %vm299 = vcmp.eq.s32.totalorder %v155, %v201
      %vm300 = vcmp.eq.s32.totalorder %v148, %v204
      %vm301 = vcmp.eq.s32.totalorder %v149, %v204
      %vm302 = vcmp.eq.s32.totalorder %v150, %v204
      %vm303 = vcmp.eq.s32.totalorder %v151, %v204
      %vm304 = vcmp.eq.s32.totalorder %v152, %v204
      %vm305 = vcmp.eq.s32.totalorder %v153, %v204
      %vm306 = vcmp.eq.s32.totalorder %v154, %v204
      %vm307 = vcmp.eq.s32.totalorder %v155, %v204
      %vm308 = vcmp.eq.s32.totalorder %v148, %v207
      %vm309 = vcmp.eq.s32.totalorder %v149, %v207
      %vm310 = vcmp.eq.s32.totalorder %v150, %v207
      %vm311 = vcmp.eq.s32.totalorder %v151, %v207
      %vm312 = vcmp.eq.s32.totalorder %v152, %v207
      %vm313 = vcmp.eq.s32.totalorder %v153, %v207
      %vm314 = vcmp.eq.s32.totalorder %v154, %v207
      %vm315 = vcmp.eq.s32.totalorder %v155, %v207
      %vm316 = vcmp.eq.s32.totalorder %v148, %v210
      %vm317 = vcmp.eq.s32.totalorder %v149, %v210
      %vm318 = vcmp.eq.s32.totalorder %v150, %v210
      %vm319 = vcmp.eq.s32.totalorder %v151, %v210
      %vm320 = vcmp.eq.s32.totalorder %v152, %v210
      %vm321 = vcmp.eq.s32.totalorder %v153, %v210
      %vm322 = vcmp.eq.s32.totalorder %v154, %v210
      %vm323 = vcmp.eq.s32.totalorder %v155, %v210
      %vm324 = vcmp.eq.s32.totalorder %v148, %v213
      %vm325 = vcmp.eq.s32.totalorder %v149, %v213
      %vm326 = vcmp.eq.s32.totalorder %v150, %v213
      %vm327 = vcmp.eq.s32.totalorder %v151, %v213
      %vm328 = vcmp.eq.s32.totalorder %v152, %v213
      %vm329 = vcmp.eq.s32.totalorder %v153, %v213
      %vm330 = vcmp.eq.s32.totalorder %v154, %v213
      %vm331 = vcmp.eq.s32.totalorder %v155, %v213
      %vm332 = vcmp.eq.s32.totalorder %v148, %v216
      %vm333 = vcmp.eq.s32.totalorder %v149, %v216
      %vm334 = vcmp.eq.s32.totalorder %v150, %v216
      %vm335 = vcmp.eq.s32.totalorder %v151, %v216
      %vm336 = vcmp.eq.s32.totalorder %v152, %v216
      %vm337 = vcmp.eq.s32.totalorder %v153, %v216
      %vm338 = vcmp.eq.s32.totalorder %v154, %v216
      %vm339 = vcmp.eq.s32.totalorder %v155, %v216
      %vm340 = vcmp.eq.s32.totalorder %v148, %v219
      %vm341 = vcmp.eq.s32.totalorder %v149, %v219
      %vm342 = vcmp.eq.s32.totalorder %v150, %v219
      %vm343 = vcmp.eq.s32.totalorder %v151, %v219
      %vm344 = vcmp.eq.s32.totalorder %v152, %v219
      %vm345 = vcmp.eq.s32.totalorder %v153, %v219
      %vm346 = vcmp.eq.s32.totalorder %v154, %v219
      %vm347 = vcmp.eq.s32.totalorder %v155, %v219
      %348 = vset.pattern.permute.xlu0 1
      %349 = vperm.xlu0 %348, %v156
      %v350 = vpop.permute.xlu0 %349
      %351 = vset.pattern.permute.xlu0 1
      %352 = vperm.xlu0 %351, %v157
      %v353 = vpop.permute.xlu0 %352
      %354 = vset.pattern.permute.xlu0 1
      %355 = vperm.xlu0 %354, %v158
      %v356 = vpop.permute.xlu0 %355
      %357 = vset.pattern.permute.xlu0 1
      %358 = vperm.xlu0 %357, %v159
      %v359 = vpop.permute.xlu0 %358
      %360 = vset.pattern.permute.xlu0 1
      %361 = vperm.xlu0 %360, %v160
      %v362 = vpop.permute.xlu0 %361
      %363 = vset.pattern.permute.xlu0 1
      %364 = vperm.xlu0 %363, %v161
      %v365 = vpop.permute.xlu0 %364
      %366 = vset.pattern.permute.xlu0 1
      %367 = vperm.xlu0 %366, %v162
      %v368 = vpop.permute.xlu0 %367
      %369 = vset.pattern.permute.xlu0 1
      %370 = vperm.xlu0 %369, %v163
      %v371 = vpop.permute.xlu0 %370
      %372 = vset.pattern.permute.xlu0 1
      %373 = vperm.xlu0 %372, %v164
      %v374 = vpop.permute.xlu0 %373
      %375 = vset.pattern.permute.xlu0 1
      %376 = vperm.xlu0 %375, %v165
      %v377 = vpop.permute.xlu0 %376
      %378 = vset.pattern.permute.xlu0 1
      %379 = vperm.xlu0 %378, %v166
      %v380 = vpop.permute.xlu0 %379
      %381 = vset.pattern.permute.xlu0 1
      %382 = vperm.xlu0 %381, %v167
      %v383 = vpop.permute.xlu0 %382
      %384 = vset.pattern.permute.xlu0 1
      %385 = vperm.xlu0 %384, %v168
      %v386 = vpop.permute.xlu0 %385
      %387 = vset.pattern.permute.xlu0 1
      %388 = vperm.xlu0 %387, %v169
      %v389 = vpop.permute.xlu0 %388
      %390 = vset.pattern.permute.xlu0 1
      %391 = vperm.xlu0 %390, %v170
      %v392 = vpop.permute.xlu0 %391
      %393 = vset.pattern.permute.xlu0 1
      %394 = vperm.xlu0 %393, %v171
      %v395 = vpop.permute.xlu0 %394
      %vm396 = vcmp.eq.s32.totalorder %v148, %v350
      %vm397 = vcmp.eq.s32.totalorder %v149, %v350
      %vm398 = vcmp.eq.s32.totalorder %v150, %v350
      %vm399 = vcmp.eq.s32.totalorder %v151, %v350
      %vm400 = vcmp.eq.s32.totalorder %v152, %v350
      %vm401 = vcmp.eq.s32.totalorder %v153, %v350
      %vm402 = vcmp.eq.s32.totalorder %v154, %v350
      %vm403 = vcmp.eq.s32.totalorder %v155, %v350
      %vm404 = vcmp.eq.s32.totalorder %v148, %v353
      %vm405 = vcmp.eq.s32.totalorder %v149, %v353
      %vm406 = vcmp.eq.s32.totalorder %v150, %v353
      %vm407 = vcmp.eq.s32.totalorder %v151, %v353
      %vm408 = vcmp.eq.s32.totalorder %v152, %v353
      %vm409 = vcmp.eq.s32.totalorder %v153, %v353
      %vm410 = vcmp.eq.s32.totalorder %v154, %v353
      %vm411 = vcmp.eq.s32.totalorder %v155, %v353
      %vm412 = vcmp.eq.s32.totalorder %v148, %v356
      %vm413 = vcmp.eq.s32.totalorder %v149, %v356
      %vm414 = vcmp.eq.s32.totalorder %v150, %v356
      %vm415 = vcmp.eq.s32.totalorder %v151, %v356
      %vm416 = vcmp.eq.s32.totalorder %v152, %v356
      %vm417 = vcmp.eq.s32.totalorder %v153, %v356
      %vm418 = vcmp.eq.s32.totalorder %v154, %v356
      %vm419 = vcmp.eq.s32.totalorder %v155, %v356
      %vm420 = vcmp.eq.s32.totalorder %v148, %v359
      %vm421 = vcmp.eq.s32.totalorder %v149, %v359
      %vm422 = vcmp.eq.s32.totalorder %v150, %v359
      %vm423 = vcmp.eq.s32.totalorder %v151, %v359
      %vm424 = vcmp.eq.s32.totalorder %v152, %v359
      %vm425 = vcmp.eq.s32.totalorder %v153, %v359
      %vm426 = vcmp.eq.s32.totalorder %v154, %v359
      %vm427 = vcmp.eq.s32.totalorder %v155, %v359
      %vm428 = vcmp.eq.s32.totalorder %v148, %v362
      %vm429 = vcmp.eq.s32.totalorder %v149, %v362
      %vm430 = vcmp.eq.s32.totalorder %v150, %v362
      %vm431 = vcmp.eq.s32.totalorder %v151, %v362
      %vm432 = vcmp.eq.s32.totalorder %v152, %v362
      %vm433 = vcmp.eq.s32.totalorder %v153, %v362
      %vm434 = vcmp.eq.s32.totalorder %v154, %v362
      %vm435 = vcmp.eq.s32.totalorder %v155, %v362
      %vm436 = vcmp.eq.s32.totalorder %v148, %v365
      %vm437 = vcmp.eq.s32.totalorder %v149, %v365
      %vm438 = vcmp.eq.s32.totalorder %v150, %v365
      %vm439 = vcmp.eq.s32.totalorder %v151, %v365
      %vm440 = vcmp.eq.s32.totalorder %v152, %v365
      %vm441 = vcmp.eq.s32.totalorder %v153, %v365
      %vm442 = vcmp.eq.s32.totalorder %v154, %v365
      %vm443 = vcmp.eq.s32.totalorder %v155, %v365
      %vm444 = vcmp.eq.s32.totalorder %v148, %v368
      %vm445 = vcmp.eq.s32.totalorder %v149, %v368
      %vm446 = vcmp.eq.s32.totalorder %v150, %v368
      %vm447 = vcmp.eq.s32.totalorder %v151, %v368
      %vm448 = vcmp.eq.s32.totalorder %v152, %v368
      %vm449 = vcmp.eq.s32.totalorder %v153, %v368
      %vm450 = vcmp.eq.s32.totalorder %v154, %v368
      %vm451 = vcmp.eq.s32.totalorder %v155, %v368
      %vm452 = vcmp.eq.s32.totalorder %v148, %v371
      %vm453 = vcmp.eq.s32.totalorder %v149, %v371
      %vm454 = vcmp.eq.s32.totalorder %v150, %v371
      %vm455 = vcmp.eq.s32.totalorder %v151, %v371
      %vm456 = vcmp.eq.s32.totalorder %v152, %v371
      %vm457 = vcmp.eq.s32.totalorder %v153, %v371
      %vm458 = vcmp.eq.s32.totalorder %v154, %v371
      %vm459 = vcmp.eq.s32.totalorder %v155, %v371
      %vm460 = vcmp.eq.s32.totalorder %v148, %v374
      %vm461 = vcmp.eq.s32.totalorder %v149, %v374
      %vm462 = vcmp.eq.s32.totalorder %v150, %v374
      %vm463 = vcmp.eq.s32.totalorder %v151, %v374
      %vm464 = vcmp.eq.s32.totalorder %v152, %v374
      %vm465 = vcmp.eq.s32.totalorder %v153, %v374
      %vm466 = vcmp.eq.s32.totalorder %v154, %v374
      %vm467 = vcmp.eq.s32.totalorder %v155, %v374
      %vm468 = vcmp.eq.s32.totalorder %v148, %v377
      %vm469 = vcmp.eq.s32.totalorder %v149, %v377
      %vm470 = vcmp.eq.s32.totalorder %v150, %v377
      %vm471 = vcmp.eq.s32.totalorder %v151, %v377
      %vm472 = vcmp.eq.s32.totalorder %v152, %v377
      %vm473 = vcmp.eq.s32.totalorder %v153, %v377
      %vm474 = vcmp.eq.s32.totalorder %v154, %v377
      %vm475 = vcmp.eq.s32.totalorder %v155, %v377
      %vm476 = vcmp.eq.s32.totalorder %v148, %v380
      %vm477 = vcmp.eq.s32.totalorder %v149, %v380
      %vm478 = vcmp.eq.s32.totalorder %v150, %v380
      %vm479 = vcmp.eq.s32.totalorder %v151, %v380
      %vm480 = vcmp.eq.s32.totalorder %v152, %v380
      %vm481 = vcmp.eq.s32.totalorder %v153, %v380
      %vm482 = vcmp.eq.s32.totalorder %v154, %v380
      %vm483 = vcmp.eq.s32.totalorder %v155, %v380
      %vm484 = vcmp.eq.s32.totalorder %v148, %v383
      %vm485 = vcmp.eq.s32.totalorder %v149, %v383
      %vm486 = vcmp.eq.s32.totalorder %v150, %v383
      %vm487 = vcmp.eq.s32.totalorder %v151, %v383
      %vm488 = vcmp.eq.s32.totalorder %v152, %v383
      %vm489 = vcmp.eq.s32.totalorder %v153, %v383
      %vm490 = vcmp.eq.s32.totalorder %v154, %v383
      %vm491 = vcmp.eq.s32.totalorder %v155, %v383
      %vm492 = vcmp.eq.s32.totalorder %v148, %v386
      %vm493 = vcmp.eq.s32.totalorder %v149, %v386
      %vm494 = vcmp.eq.s32.totalorder %v150, %v386
      %vm495 = vcmp.eq.s32.totalorder %v151, %v386
      %vm496 = vcmp.eq.s32.totalorder %v152, %v386
      %vm497 = vcmp.eq.s32.totalorder %v153, %v386
      %vm498 = vcmp.eq.s32.totalorder %v154, %v386
      %vm499 = vcmp.eq.s32.totalorder %v155, %v386
      %vm500 = vcmp.eq.s32.totalorder %v148, %v389
      %vm501 = vcmp.eq.s32.totalorder %v149, %v389
      %vm502 = vcmp.eq.s32.totalorder %v150, %v389
      %vm503 = vcmp.eq.s32.totalorder %v151, %v389
      %vm504 = vcmp.eq.s32.totalorder %v152, %v389
      %vm505 = vcmp.eq.s32.totalorder %v153, %v389
      %vm506 = vcmp.eq.s32.totalorder %v154, %v389
      %vm507 = vcmp.eq.s32.totalorder %v155, %v389
      %vm508 = vcmp.eq.s32.totalorder %v148, %v392
      %vm509 = vcmp.eq.s32.totalorder %v149, %v392
      %vm510 = vcmp.eq.s32.totalorder %v150, %v392
      %vm511 = vcmp.eq.s32.totalorder %v151, %v392
      %vm512 = vcmp.eq.s32.totalorder %v152, %v392
      %vm513 = vcmp.eq.s32.totalorder %v153, %v392
      %vm514 = vcmp.eq.s32.totalorder %v154, %v392
      %vm515 = vcmp.eq.s32.totalorder %v155, %v392
      %vm516 = vcmp.eq.s32.totalorder %v148, %v395
      %vm517 = vcmp.eq.s32.totalorder %v149, %v395
      %vm518 = vcmp.eq.s32.totalorder %v150, %v395
      %vm519 = vcmp.eq.s32.totalorder %v151, %v395
      %vm520 = vcmp.eq.s32.totalorder %v152, %v395
      %vm521 = vcmp.eq.s32.totalorder %v153, %v395
      %vm522 = vcmp.eq.s32.totalorder %v154, %v395
      %vm523 = vcmp.eq.s32.totalorder %v155, %v395
      %vm524 = vmor %vm220, %vm396
      %vm525 = vmor %vm221, %vm397
      %vm526 = vmor %vm222, %vm398
      %vm527 = vmor %vm223, %vm399
      %vm528 = vmor %vm224, %vm400
      %vm529 = vmor %vm225, %vm401
      %vm530 = vmor %vm226, %vm402
      %vm531 = vmor %vm227, %vm403
      %vm532 = vmor %vm228, %vm404
      %vm533 = vmor %vm229, %vm405
      %vm534 = vmor %vm230, %vm406
      %vm535 = vmor %vm231, %vm407
      %vm536 = vmor %vm232, %vm408
      %vm537 = vmor %vm233, %vm409
      %vm538 = vmor %vm234, %vm410
      %vm539 = vmor %vm235, %vm411
      %vm540 = vmor %vm236, %vm412
      %vm541 = vmor %vm237, %vm413
      %vm542 = vmor %vm238, %vm414
      %vm543 = vmor %vm239, %vm415
      %vm544 = vmor %vm240, %vm416
      %vm545 = vmor %vm241, %vm417
      %vm546 = vmor %vm242, %vm418
      %vm547 = vmor %vm243, %vm419
      %vm548 = vmor %vm244, %vm420
      %vm549 = vmor %vm245, %vm421
      %vm550 = vmor %vm246, %vm422
      %vm551 = vmor %vm247, %vm423
      %vm552 = vmor %vm248, %vm424
      %vm553 = vmor %vm249, %vm425
      %vm554 = vmor %vm250, %vm426
      %vm555 = vmor %vm251, %vm427
      %vm556 = vmor %vm252, %vm428
      %vm557 = vmor %vm253, %vm429
      %vm558 = vmor %vm254, %vm430
      %vm559 = vmor %vm255, %vm431
      %vm560 = vmor %vm256, %vm432
      %vm561 = vmor %vm257, %vm433
      %vm562 = vmor %vm258, %vm434
      %vm563 = vmor %vm259, %vm435
      %vm564 = vmor %vm260, %vm436
      %vm565 = vmor %vm261, %vm437
      %vm566 = vmor %vm262, %vm438
      %vm567 = vmor %vm263, %vm439
      %vm568 = vmor %vm264, %vm440
      %vm569 = vmor %vm265, %vm441
      %vm570 = vmor %vm266, %vm442
      %vm571 = vmor %vm267, %vm443
      %vm572 = vmor %vm268, %vm444
      %vm573 = vmor %vm269, %vm445
      %vm574 = vmor %vm270, %vm446
      %vm575 = vmor %vm271, %vm447
      %vm576 = vmor %vm272, %vm448
      %vm577 = vmor %vm273, %vm449
      %vm578 = vmor %vm274, %vm450
      %vm579 = vmor %vm275, %vm451
      %vm580 = vmor %vm276, %vm452
      %vm581 = vmor %vm277, %vm453
      %vm582 = vmor %vm278, %vm454
      %vm583 = vmor %vm279, %vm455
      %vm584 = vmor %vm280, %vm456
      %vm585 = vmor %vm281, %vm457
      %vm586 = vmor %vm282, %vm458
      %vm587 = vmor %vm283, %vm459
      %vm588 = vmor %vm284, %vm460
      %vm589 = vmor %vm285, %vm461
      %vm590 = vmor %vm286, %vm462
      %vm591 = vmor %vm287, %vm463
      %vm592 = vmor %vm288, %vm464
      %vm593 = vmor %vm289, %vm465
      %vm594 = vmor %vm290, %vm466
      %vm595 = vmor %vm291, %vm467
      %vm596 = vmor %vm292, %vm468
      %vm597 = vmor %vm293, %vm469
      %vm598 = vmor %vm294, %vm470
      %vm599 = vmor %vm295, %vm471
      %vm600 = vmor %vm296, %vm472
      %vm601 = vmor %vm297, %vm473
      %vm602 = vmor %vm298, %vm474
      %vm603 = vmor %vm299, %vm475
      %vm604 = vmor %vm300, %vm476
      %vm605 = vmor %vm301, %vm477
      %vm606 = vmor %vm302, %vm478
      %vm607 = vmor %vm303, %vm479
      %vm608 = vmor %vm304, %vm480
      %vm609 = vmor %vm305, %vm481
      %vm610 = vmor %vm306, %vm482
      %vm611 = vmor %vm307, %vm483
      %vm612 = vmor %vm308, %vm484
      %vm613 = vmor %vm309, %vm485
      %vm614 = vmor %vm310, %vm486
      %vm615 = vmor %vm311, %vm487
      %vm616 = vmor %vm312, %vm488
      %vm617 = vmor %vm313, %vm489
      %vm618 = vmor %vm314, %vm490
      %vm619 = vmor %vm315, %vm491
      %vm620 = vmor %vm316, %vm492
      %vm621 = vmor %vm317, %vm493
      %vm622 = vmor %vm318, %vm494
      %vm623 = vmor %vm319, %vm495
      %vm624 = vmor %vm320, %vm496
      %vm625 = vmor %vm321, %vm497
      %vm626 = vmor %vm322, %vm498
      %vm627 = vmor %vm323, %vm499
      %vm628 = vmor %vm324, %vm500
      %vm629 = vmor %vm325, %vm501
      %vm630 = vmor %vm326, %vm502
      %vm631 = vmor %vm327, %vm503
      %vm632 = vmor %vm328, %vm504
      %vm633 = vmor %vm329, %vm505
      %vm634 = vmor %vm330, %vm506
      %vm635 = vmor %vm331, %vm507
      %vm636 = vmor %vm332, %vm508
      %vm637 = vmor %vm333, %vm509
      %vm638 = vmor %vm334, %vm510
      %vm639 = vmor %vm335, %vm511
      %vm640 = vmor %vm336, %vm512
      %vm641 = vmor %vm337, %vm513
      %vm642 = vmor %vm338, %vm514
      %vm643 = vmor %vm339, %vm515
      %vm644 = vmor %vm340, %vm516
      %vm645 = vmor %vm341, %vm517
      %vm646 = vmor %vm342, %vm518
      %vm647 = vmor %vm343, %vm519
      %vm648 = vmor %vm344, %vm520
      %vm649 = vmor %vm345, %vm521
      %vm650 = vmor %vm346, %vm522
      %vm651 = vmor %vm347, %vm523
      %v652 = vsel %vm524, 1, 0
      %v653 = vsel %vm525, 1, 0
      %v654 = vsel %vm526, 1, 0
      %v655 = vsel %vm527, 1, 0
      %v656 = vsel %vm528, 1, 0
      %v657 = vsel %vm529, 1, 0
      %v658 = vsel %vm530, 1, 0
      %v659 = vsel %vm531, 1, 0
      %v660 = vsel %vm532, 1, 0
      %v661 = vsel %vm533, 1, 0
      %v662 = vsel %vm534, 1, 0
      %v663 = vsel %vm535, 1, 0
      %v664 = vsel %vm536, 1, 0
      %v665 = vsel %vm537, 1, 0
      %v666 = vsel %vm538, 1, 0
      %v667 = vsel %vm539, 1, 0
      %v668 = vsel %vm540, 1, 0
      %v669 = vsel %vm541, 1, 0
      %v670 = vsel %vm542, 1, 0
      %v671 = vsel %vm543, 1, 0
      %v672 = vsel %vm544, 1, 0
      %v673 = vsel %vm545, 1, 0
      %v674 = vsel %vm546, 1, 0
      %v675 = vsel %vm547, 1, 0
      %v676 = vsel %vm548, 1, 0
      %v677 = vsel %vm549, 1, 0
      %v678 = vsel %vm550, 1, 0
      %v679 = vsel %vm551, 1, 0
      %v680 = vsel %vm552, 1, 0
      %v681 = vsel %vm553, 1, 0
      %v682 = vsel %vm554, 1, 0
      %v683 = vsel %vm555, 1, 0
      %v684 = vsel %vm556, 1, 0
      %v685 = vsel %vm557, 1, 0
      %v686 = vsel %vm558, 1, 0
      %v687 = vsel %vm559, 1, 0
      %v688 = vsel %vm560, 1, 0
      %v689 = vsel %vm561, 1, 0
      %v690 = vsel %vm562, 1, 0
      %v691 = vsel %vm563, 1, 0
      %v692 = vsel %vm564, 1, 0
      %v693 = vsel %vm565, 1, 0
      %v694 = vsel %vm566, 1, 0
      %v695 = vsel %vm567, 1, 0
      %v696 = vsel %vm568, 1, 0
      %v697 = vsel %vm569, 1, 0
      %v698 = vsel %vm570, 1, 0
      %v699 = vsel %vm571, 1, 0
      %v700 = vsel %vm572, 1, 0
      %v701 = vsel %vm573, 1, 0
      %v702 = vsel %vm574, 1, 0
      %v703 = vsel %vm575, 1, 0
      %v704 = vsel %vm576, 1, 0
      %v705 = vsel %vm577, 1, 0
      %v706 = vsel %vm578, 1, 0
      %v707 = vsel %vm579, 1, 0
      %v708 = vsel %vm580, 1, 0
      %v709 = vsel %vm581, 1, 0
      %v710 = vsel %vm582, 1, 0
      %v711 = vsel %vm583, 1, 0
      %v712 = vsel %vm584, 1, 0
      %v713 = vsel %vm585, 1, 0
      %v714 = vsel %vm586, 1, 0
      %v715 = vsel %vm587, 1, 0
      %v716 = vsel %vm588, 1, 0
      %v717 = vsel %vm589, 1, 0
      %v718 = vsel %vm590, 1, 0
      %v719 = vsel %vm591, 1, 0
      %v720 = vsel %vm592, 1, 0
      %v721 = vsel %vm593, 1, 0
      %v722 = vsel %vm594, 1, 0
      %v723 = vsel %vm595, 1, 0
      %v724 = vsel %vm596, 1, 0
      %v725 = vsel %vm597, 1, 0
      %v726 = vsel %vm598, 1, 0
      %v727 = vsel %vm599, 1, 0
      %v728 = vsel %vm600, 1, 0
      %v729 = vsel %vm601, 1, 0
      %v730 = vsel %vm602, 1, 0
      %v731 = vsel %vm603, 1, 0
      %v732 = vsel %vm604, 1, 0
      %v733 = vsel %vm605, 1, 0
      %v734 = vsel %vm606, 1, 0
      %v735 = vsel %vm607, 1, 0
      %v736 = vsel %vm608, 1, 0
      %v737 = vsel %vm609, 1, 0
      %v738 = vsel %vm610, 1, 0
      %v739 = vsel %vm611, 1, 0
      %v740 = vsel %vm612, 1, 0
      %v741 = vsel %vm613, 1, 0
      %v742 = vsel %vm614, 1, 0
      %v743 = vsel %vm615, 1, 0
      %v744 = vsel %vm616, 1, 0
      %v745 = vsel %vm617, 1, 0
      %v746 = vsel %vm618, 1, 0
      %v747 = vsel %vm619, 1, 0
      %v748 = vsel %vm620, 1, 0
      %v749 = vsel %vm621, 1, 0
      %v750 = vsel %vm622, 1, 0
      %v751 = vsel %vm623, 1, 0
      %v752 = vsel %vm624, 1, 0
      %v753 = vsel %vm625, 1, 0
      %v754 = vsel %vm626, 1, 0
      %v755 = vsel %vm627, 1, 0
      %v756 = vsel %vm628, 1, 0
      %v757 = vsel %vm629, 1, 0
      %v758 = vsel %vm630, 1, 0
      %v759 = vsel %vm631, 1, 0
      %v760 = vsel %vm632, 1, 0
      %v761 = vsel %vm633, 1, 0
      %v762 = vsel %vm634, 1, 0
      %v763 = vsel %vm635, 1, 0
      %v764 = vsel %vm636, 1, 0
      %v765 = vsel %vm637, 1, 0
      %v766 = vsel %vm638, 1, 0
      %v767 = vsel %vm639, 1, 0
      %v768 = vsel %vm640, 1, 0
      %v769 = vsel %vm641, 1, 0
      %v770 = vsel %vm642, 1, 0
      %v771 = vsel %vm643, 1, 0
      %v772 = vsel %vm644, 1, 0
      %v773 = vsel %vm645, 1, 0
      %v774 = vsel %vm646, 1, 0
      %v775 = vsel %vm647, 1, 0
      %v776 = vsel %vm648, 1, 0
      %v777 = vsel %vm649, 1, 0
      %v778 = vsel %vm650, 1, 0
      %v779 = vsel %vm651, 1, 0
      %v780 = vcvt.s32.f32 %v652
      %v781 = vcvt.s32.f32 %v653
      %v782 = vcvt.s32.f32 %v654
      %v783 = vcvt.s32.f32 %v655
      %v784 = vcvt.s32.f32 %v656
      %v785 = vcvt.s32.f32 %v657
      %v786 = vcvt.s32.f32 %v658
      %v787 = vcvt.s32.f32 %v659
      %v788 = vcvt.s32.f32 %v660
      %v789 = vcvt.s32.f32 %v661
      %v790 = vcvt.s32.f32 %v662
      %v791 = vcvt.s32.f32 %v663
      %v792 = vcvt.s32.f32 %v664
      %v793 = vcvt.s32.f32 %v665
      %v794 = vcvt.s32.f32 %v666
      %v795 = vcvt.s32.f32 %v667
      %v796 = vcvt.s32.f32 %v668
      %v797 = vcvt.s32.f32 %v669
      %v798 = vcvt.s32.f32 %v670
      %v799 = vcvt.s32.f32 %v671
      %v800 = vcvt.s32.f32 %v672
      %v801 = vcvt.s32.f32 %v673
      %v802 = vcvt.s32.f32 %v674
      %v803 = vcvt.s32.f32 %v675
      %v804 = vcvt.s32.f32 %v676
      %v805 = vcvt.s32.f32 %v677
      %v806 = vcvt.s32.f32 %v678
      %v807 = vcvt.s32.f32 %v679
      %v808 = vcvt.s32.f32 %v680
      %v809 = vcvt.s32.f32 %v681
      %v810 = vcvt.s32.f32 %v682
      %v811 = vcvt.s32.f32 %v683
      %v812 = vcvt.s32.f32 %v684
      %v813 = vcvt.s32.f32 %v685
      %v814 = vcvt.s32.f32 %v686
      %v815 = vcvt.s32.f32 %v687
      %v816 = vcvt.s32.f32 %v688
      %v817 = vcvt.s32.f32 %v689
      %v818 = vcvt.s32.f32 %v690
      %v819 = vcvt.s32.f32 %v691
      %v820 = vcvt.s32.f32 %v692
      %v821 = vcvt.s32.f32 %v693
      %v822 = vcvt.s32.f32 %v694
      %v823 = vcvt.s32.f32 %v695
      %v824 = vcvt.s32.f32 %v696
      %v825 = vcvt.s32.f32 %v697
      %v826 = vcvt.s32.f32 %v698
      %v827 = vcvt.s32.f32 %v699
      %v828 = vcvt.s32.f32 %v700
      %v829 = vcvt.s32.f32 %v701
      %v830 = vcvt.s32.f32 %v702
      %v831 = vcvt.s32.f32 %v703
      %v832 = vcvt.s32.f32 %v704
      %v833 = vcvt.s32.f32 %v705
      %v834 = vcvt.s32.f32 %v706
      %v835 = vcvt.s32.f32 %v707
      %v836 = vcvt.s32.f32 %v708
      %v837 = vcvt.s32.f32 %v709
      %v838 = vcvt.s32.f32 %v710
      %v839 = vcvt.s32.f32 %v711
      %v840 = vcvt.s32.f32 %v712
      %v841 = vcvt.s32.f32 %v713
      %v842 = vcvt.s32.f32 %v714
      %v843 = vcvt.s32.f32 %v715
      %v844 = vcvt.s32.f32 %v716
      %v845 = vcvt.s32.f32 %v717
      %v846 = vcvt.s32.f32 %v718
      %v847 = vcvt.s32.f32 %v719
      %v848 = vcvt.s32.f32 %v720
      %v849 = vcvt.s32.f32 %v721
      %v850 = vcvt.s32.f32 %v722
      %v851 = vcvt.s32.f32 %v723
      %v852 = vcvt.s32.f32 %v724
      %v853 = vcvt.s32.f32 %v725
      %v854 = vcvt.s32.f32 %v726
      %v855 = vcvt.s32.f32 %v727
      %v856 = vcvt.s32.f32 %v728
      %v857 = vcvt.s32.f32 %v729
      %v858 = vcvt.s32.f32 %v730
      %v859 = vcvt.s32.f32 %v731
      %v860 = vcvt.s32.f32 %v732
      %v861 = vcvt.s32.f32 %v733
      %v862 = vcvt.s32.f32 %v734
      %v863 = vcvt.s32.f32 %v735
      %v864 = vcvt.s32.f32 %v736
      %v865 = vcvt.s32.f32 %v737
      %v866 = vcvt.s32.f32 %v738
      %v867 = vcvt.s32.f32 %v739
      %v868 = vcvt.s32.f32 %v740
      %v869 = vcvt.s32.f32 %v741
      %v870 = vcvt.s32.f32 %v742
      %v871 = vcvt.s32.f32 %v743
      %v872 = vcvt.s32.f32 %v744
      %v873 = vcvt.s32.f32 %v745
      %v874 = vcvt.s32.f32 %v746
      %v875 = vcvt.s32.f32 %v747
      %v876 = vcvt.s32.f32 %v748
      %v877 = vcvt.s32.f32 %v749
      %v878 = vcvt.s32.f32 %v750
      %v879 = vcvt.s32.f32 %v751
      %v880 = vcvt.s32.f32 %v752
      %v881 = vcvt.s32.f32 %v753
      %v882 = vcvt.s32.f32 %v754
      %v883 = vcvt.s32.f32 %v755
      %v884 = vcvt.s32.f32 %v756
      %v885 = vcvt.s32.f32 %v757
      %v886 = vcvt.s32.f32 %v758
      %v887 = vcvt.s32.f32 %v759
      %v888 = vcvt.s32.f32 %v760
      %v889 = vcvt.s32.f32 %v761
      %v890 = vcvt.s32.f32 %v762
      %v891 = vcvt.s32.f32 %v763
      %v892 = vcvt.s32.f32 %v764
      %v893 = vcvt.s32.f32 %v765
      %v894 = vcvt.s32.f32 %v766
      %v895 = vcvt.s32.f32 %v767
      %v896 = vcvt.s32.f32 %v768
      %v897 = vcvt.s32.f32 %v769
      %v898 = vcvt.s32.f32 %v770
      %v899 = vcvt.s32.f32 %v771
      %v900 = vcvt.s32.f32 %v772
      %v901 = vcvt.s32.f32 %v773
      %v902 = vcvt.s32.f32 %v774
      %v903 = vcvt.s32.f32 %v775
      %v904 = vcvt.s32.f32 %v776
      %v905 = vcvt.s32.f32 %v777
      %v906 = vcvt.s32.f32 %v778
      %v907 = vcvt.s32.f32 %v779
      %v908 = vld [vmem:[%s1] sm:$0xff]
      %v909 = vld [vmem:[%s1 + $0x8] sm:$0xff]
      %v910 = vld [vmem:[%s1 + $0x10] sm:$0xff]
      %v911 = vld [vmem:[%s1 + $0x18] sm:$0xff]
      %v912 = vld [vmem:[%s1 + $0x20] sm:$0xff]
      %v913 = vld [vmem:[%s1 + $0x28] sm:$0xff]
      %v914 = vld [vmem:[%s1 + $0x30] sm:$0xff]
      %v915 = vld [vmem:[%s1 + $0x38] sm:$0xff]
      %v916 = vld [vmem:[%s1 + $0x40] sm:$0xff]
      %v917 = vld [vmem:[%s1 + $0x48] sm:$0xff]
      %v918 = vld [vmem:[%s1 + $0x50] sm:$0xff]
      %v919 = vld [vmem:[%s1 + $0x58] sm:$0xff]
      %v920 = vld [vmem:[%s1 + $0x60] sm:$0xff]
      %v921 = vld [vmem:[%s1 + $0x68] sm:$0xff]
      %v922 = vld [vmem:[%s1 + $0x70] sm:$0xff]
      %v923 = vld [vmem:[%s1 + $0x78] sm:$0xff]
      %v924 = vld [vmem:[%s1 + $0x80] sm:$0xff]
      %v925 = vld [vmem:[%s1 + $0x88] sm:$0xff]
      %v926 = vld [vmem:[%s1 + $0x90] sm:$0xff]
      %v927 = vld [vmem:[%s1 + $0x98] sm:$0xff]
      %v928 = vld [vmem:[%s1 + $0xa0] sm:$0xff]
      %v929 = vld [vmem:[%s1 + $0xa8] sm:$0xff]
      %v930 = vld [vmem:[%s1 + $0xb0] sm:$0xff]
      %v931 = vld [vmem:[%s1 + $0xb8] sm:$0xff]
      %v932 = vld [vmem:[%s1 + $0xc0] sm:$0xff]
      %v933 = vld [vmem:[%s1 + $0xc8] sm:$0xff]
      %v934 = vld [vmem:[%s1 + $0xd0] sm:$0xff]
      %v935 = vld [vmem:[%s1 + $0xd8] sm:$0xff]
      %v936 = vld [vmem:[%s1 + $0xe0] sm:$0xff]
      %v937 = vld [vmem:[%s1 + $0xe8] sm:$0xff]
      %v938 = vld [vmem:[%s1 + $0xf0] sm:$0xff]
      %v939 = vld [vmem:[%s1 + $0xf8] sm:$0xff]
      %v940 = vld [vmem:[%s1 + $0x100] sm:$0xff]
      %v941 = vld [vmem:[%s1 + $0x108] sm:$0xff]
      %v942 = vld [vmem:[%s1 + $0x110] sm:$0xff]
      %v943 = vld [vmem:[%s1 + $0x118] sm:$0xff]
      %v944 = vld [vmem:[%s1 + $0x120] sm:$0xff]
      %v945 = vld [vmem:[%s1 + $0x128] sm:$0xff]
      %v946 = vld [vmem:[%s1 + $0x130] sm:$0xff]
      %v947 = vld [vmem:[%s1 + $0x138] sm:$0xff]
      %v948 = vld [vmem:[%s1 + $0x140] sm:$0xff]
      %v949 = vld [vmem:[%s1 + $0x148] sm:$0xff]
      %v950 = vld [vmem:[%s1 + $0x150] sm:$0xff]
      %v951 = vld [vmem:[%s1 + $0x158] sm:$0xff]
      %v952 = vld [vmem:[%s1 + $0x160] sm:$0xff]
      %v953 = vld [vmem:[%s1 + $0x168] sm:$0xff]
      %v954 = vld [vmem:[%s1 + $0x170] sm:$0xff]
      %v955 = vld [vmem:[%s1 + $0x178] sm:$0xff]
      %v956 = vld [vmem:[%s1 + $0x180] sm:$0xff]
      %v957 = vld [vmem:[%s1 + $0x188] sm:$0xff]
      %v958 = vld [vmem:[%s1 + $0x190] sm:$0xff]
      %v959 = vld [vmem:[%s1 + $0x198] sm:$0xff]
      %v960 = vld [vmem:[%s1 + $0x1a0] sm:$0xff]
      %v961 = vld [vmem:[%s1 + $0x1a8] sm:$0xff]
      %v962 = vld [vmem:[%s1 + $0x1b0] sm:$0xff]
      %v963 = vld [vmem:[%s1 + $0x1b8] sm:$0xff]
      %v964 = vld [vmem:[%s1 + $0x1c0] sm:$0xff]
      %v965 = vld [vmem:[%s1 + $0x1c8] sm:$0xff]
      %v966 = vld [vmem:[%s1 + $0x1d0] sm:$0xff]
      %v967 = vld [vmem:[%s1 + $0x1d8] sm:$0xff]
      %v968 = vld [vmem:[%s1 + $0x1e0] sm:$0xff]
      %v969 = vld [vmem:[%s1 + $0x1e8] sm:$0xff]
      %v970 = vld [vmem:[%s1 + $0x1f0] sm:$0xff]
      %v971 = vld [vmem:[%s1 + $0x1f8] sm:$0xff]
      %v972 = vld [vmem:[%s1 + $0x200] sm:$0xff]
      %v973 = vld [vmem:[%s1 + $0x208] sm:$0xff]
      %v974 = vld [vmem:[%s1 + $0x210] sm:$0xff]
      %v975 = vld [vmem:[%s1 + $0x218] sm:$0xff]
      %v976 = vld [vmem:[%s1 + $0x220] sm:$0xff]
      %v977 = vld [vmem:[%s1 + $0x228] sm:$0xff]
      %v978 = vld [vmem:[%s1 + $0x230] sm:$0xff]
      %v979 = vld [vmem:[%s1 + $0x238] sm:$0xff]
      %v980 = vld [vmem:[%s1 + $0x240] sm:$0xff]
      %v981 = vld [vmem:[%s1 + $0x248] sm:$0xff]
      %v982 = vld [vmem:[%s1 + $0x250] sm:$0xff]
      %v983 = vld [vmem:[%s1 + $0x258] sm:$0xff]
      %v984 = vld [vmem:[%s1 + $0x260] sm:$0xff]
      %v985 = vld [vmem:[%s1 + $0x268] sm:$0xff]
      %v986 = vld [vmem:[%s1 + $0x270] sm:$0xff]
      %v987 = vld [vmem:[%s1 + $0x278] sm:$0xff]
      %v988 = vld [vmem:[%s1 + $0x280] sm:$0xff]
      %v989 = vld [vmem:[%s1 + $0x288] sm:$0xff]
      %v990 = vld [vmem:[%s1 + $0x290] sm:$0xff]
      %v991 = vld [vmem:[%s1 + $0x298] sm:$0xff]
      %v992 = vld [vmem:[%s1 + $0x2a0] sm:$0xff]
      %v993 = vld [vmem:[%s1 + $0x2a8] sm:$0xff]
      %v994 = vld [vmem:[%s1 + $0x2b0] sm:$0xff]
      %v995 = vld [vmem:[%s1 + $0x2b8] sm:$0xff]
      %v996 = vld [vmem:[%s1 + $0x2c0] sm:$0xff]
      %v997 = vld [vmem:[%s1 + $0x2c8] sm:$0xff]
      %v998 = vld [vmem:[%s1 + $0x2d0] sm:$0xff]
      %v999 = vld [vmem:[%s1 + $0x2d8] sm:$0xff]
      %v1000 = vld [vmem:[%s1 + $0x2e0] sm:$0xff]
      %v1001 = vld [vmem:[%s1 + $0x2e8] sm:$0xff]
      %v1002 = vld [vmem:[%s1 + $0x2f0] sm:$0xff]
      %v1003 = vld [vmem:[%s1 + $0x2f8] sm:$0xff]
      %v1004 = vld [vmem:[%s1 + $0x300] sm:$0xff]
      %v1005 = vld [vmem:[%s1 + $0x308] sm:$0xff]
      %v1006 = vld [vmem:[%s1 + $0x310] sm:$0xff]
      %v1007 = vld [vmem:[%s1 + $0x318] sm:$0xff]
      %v1008 = vld [vmem:[%s1 + $0x320] sm:$0xff]
      %v1009 = vld [vmem:[%s1 + $0x328] sm:$0xff]
      %v1010 = vld [vmem:[%s1 + $0x330] sm:$0xff]
      %v1011 = vld [vmem:[%s1 + $0x338] sm:$0xff]
      %v1012 = vld [vmem:[%s1 + $0x340] sm:$0xff]
      %v1013 = vld [vmem:[%s1 + $0x348] sm:$0xff]
      %v1014 = vld [vmem:[%s1 + $0x350] sm:$0xff]
      %v1015 = vld [vmem:[%s1 + $0x358] sm:$0xff]
      %v1016 = vld [vmem:[%s1 + $0x360] sm:$0xff]
      %v1017 = vld [vmem:[%s1 + $0x368] sm:$0xff]
      %v1018 = vld [vmem:[%s1 + $0x370] sm:$0xff]
      %v1019 = vld [vmem:[%s1 + $0x378] sm:$0xff]
      %v1020 = vld [vmem:[%s1 + $0x380] sm:$0xff]
      %v1021 = vld [vmem:[%s1 + $0x388] sm:$0xff]
      %v1022 = vld [vmem:[%s1 + $0x390] sm:$0xff]
      %v1023 = vld [vmem:[%s1 + $0x398] sm:$0xff]
      %v1024 = vld [vmem:[%s1 + $0x3a0] sm:$0xff]
      %v1025 = vld [vmem:[%s1 + $0x3a8] sm:$0xff]
      %v1026 = vld [vmem:[%s1 + $0x3b0] sm:$0xff]
      %v1027 = vld [vmem:[%s1 + $0x3b8] sm:$0xff]
      %v1028 = vld [vmem:[%s1 + $0x3c0] sm:$0xff]
      %v1029 = vld [vmem:[%s1 + $0x3c8] sm:$0xff]
      %v1030 = vld [vmem:[%s1 + $0x3d0] sm:$0xff]
      %v1031 = vld [vmem:[%s1 + $0x3d8] sm:$0xff]
      %v1032 = vld [vmem:[%s1 + $0x3e0] sm:$0xff]
      %v1033 = vld [vmem:[%s1 + $0x3e8] sm:$0xff]
      %v1034 = vld [vmem:[%s1 + $0x3f0] sm:$0xff]
      %v1035 = vld [vmem:[%s1 + $0x3f8] sm:$0xff]
      %1036 = vmatprep.subr.mxu0 0.0
      %1037 = vmatpush1.msra.mxu0 %v923
      %1038 = vmatprep.subr.mxu0 0.0
      %1039 = vmatpush1.msra.mxu0 %v922
      %1040 = vmatprep.subr.mxu0 0.0
      %1041 = vmatpush1.msra.mxu0 %v921
      %1042 = vmatprep.subr.mxu0 0.0
      %1043 = vmatpush1.msra.mxu0 %v920
      %1044 = vmatprep.subr.mxu0 0.0
      %1045 = vmatpush1.msra.mxu0 %v919
      %1046 = vmatprep.subr.mxu0 0.0
      %1047 = vmatpush1.msra.mxu0 %v918
      %1048 = vmatprep.subr.mxu0 0.0
      %1049 = vmatpush1.msra.mxu0 %v917
      %1050 = vmatprep.subr.mxu0 0.0
      %1051 = vmatpush1.msra.mxu0 %v916
      %1052 = vmatprep.subr.mxu0 0.0
      %1053 = vmatpush1.msra.mxu0 %v915
      %1054 = vmatprep.subr.mxu0 0.0
      %1055 = vmatpush1.msra.mxu0 %v914
      %1056 = vmatprep.subr.mxu0 0.0
      %1057 = vmatpush1.msra.mxu0 %v913
      %1058 = vmatprep.subr.mxu0 0.0
      %1059 = vmatpush1.msra.mxu0 %v912
      %1060 = vmatprep.subr.mxu0 0.0
      %1061 = vmatpush1.msra.mxu0 %v911
      %1062 = vmatprep.subr.mxu0 0.0
      %1063 = vmatpush1.msra.mxu0 %v910
      %1064 = vmatprep.subr.mxu0 0.0
      %1065 = vmatpush1.msra.mxu0 %v909
      %1066 = vmatprep.subr.mxu0 0.0
      %1067 = vmatpush1.msra.mxu0 %v908
      %1068 = vmatprep.subr.mxu0 0.0
      %1069 = vmatpush2.msra.mxu0 %v939
      %1070 = vmatprep.subr.mxu0 0.0
      %1071 = vmatpush2.msra.mxu0 %v938
      %1072 = vmatprep.subr.mxu0 0.0
      %1073 = vmatpush2.msra.mxu0 %v937
      %1074 = vmatprep.subr.mxu0 0.0
      %1075 = vmatpush2.msra.mxu0 %v936
      %1076 = vmatprep.subr.mxu0 0.0
      %1077 = vmatpush2.msra.mxu0 %v935
      %1078 = vmatprep.subr.mxu0 0.0
      %1079 = vmatpush2.msra.mxu0 %v934
      %1080 = vmatprep.subr.mxu0 0.0
      %1081 = vmatpush2.msra.mxu0 %v933
      %1082 = vmatprep.subr.mxu0 0.0
      %1083 = vmatpush2.msra.mxu0 %v932
      %1084 = vmatprep.subr.mxu0 0.0
      %1085 = vmatpush2.msra.mxu0 %v931
      %1086 = vmatprep.subr.mxu0 0.0
      %1087 = vmatpush2.msra.mxu0 %v930
      %1088 = vmatprep.subr.mxu0 0.0
      %1089 = vmatpush2.msra.mxu0 %v929
      %1090 = vmatprep.subr.mxu0 0.0
      %1091 = vmatpush2.msra.mxu0 %v928
      %1092 = vmatprep.subr.mxu0 0.0
      %1093 = vmatpush2.msra.mxu0 %v927
      %1094 = vmatprep.subr.mxu0 0.0
      %1095 = vmatpush2.msra.mxu0 %v926
      %1096 = vmatprep.subr.mxu0 0.0
      %1097 = vmatpush2.msra.mxu0 %v925
      %1098 = vmatprep.subr.mxu0 0.0
      %1099 = vmatpush2.msra.mxu0 %v924
      %1100 = vmatprep.mubr.f32.mxu0 %v781
      %1101 = vmatmul.mubr.f32.gmra.mxu0 %v780
      %v1102 = vpop.f32.mrf.mxu0
      %v1103 = vadd.f32 0.0, %v1102
      %v1104 = vpop.f32.mrf.mxu0
      %1105 = vmatprep.mubr.f32.mxu0 %v789
      %1106 = vmatmul.mubr.f32.gmra.mxu0 %v788
      %v1107 = vpop.f32.mrf.mxu0
      %v1108 = vadd.f32 0.0, %v1107
      %v1109 = vpop.f32.mrf.mxu0
      %1110 = vmatprep.mubr.f32.mxu0 %v797
      %1111 = vmatmul.mubr.f32.gmra.mxu0 %v796
      %v1112 = vpop.f32.mrf.mxu0
      %v1113 = vadd.f32 0.0, %v1112
      %v1114 = vpop.f32.mrf.mxu0
      %1115 = vmatprep.mubr.f32.mxu0 %v805
      %1116 = vmatmul.mubr.f32.gmra.mxu0 %v804
      %v1117 = vpop.f32.mrf.mxu0
      %v1118 = vadd.f32 0.0, %v1117
      %v1119 = vpop.f32.mrf.mxu0
      %1120 = vmatprep.mubr.f32.mxu0 %v813
      %1121 = vmatmul.mubr.f32.gmra.mxu0 %v812
      %v1122 = vpop.f32.mrf.mxu0
      %v1123 = vadd.f32 0.0, %v1122
      %v1124 = vpop.f32.mrf.mxu0
      %1125 = vmatprep.mubr.f32.mxu0 %v821
      %1126 = vmatmul.mubr.f32.gmra.mxu0 %v820
      %v1127 = vpop.f32.mrf.mxu0
      %v1128 = vadd.f32 0.0, %v1127
      %v1129 = vpop.f32.mrf.mxu0
      %1130 = vmatprep.mubr.f32.mxu0 %v829
      %1131 = vmatmul.mubr.f32.gmra.mxu0 %v828
      %v1132 = vpop.f32.mrf.mxu0
      %v1133 = vadd.f32 0.0, %v1132
      %v1134 = vpop.f32.mrf.mxu0
      %1135 = vmatprep.mubr.f32.mxu0 %v837
      %1136 = vmatmul.mubr.f32.gmra.mxu0 %v836
      %v1137 = vpop.f32.mrf.mxu0
      %v1138 = vadd.f32 0.0, %v1137
      %v1139 = vpop.f32.mrf.mxu0
      %1140 = vmatprep.mubr.f32.mxu0 %v845
      %1141 = vmatmul.mubr.f32.gmra.mxu0 %v844
      %v1142 = vpop.f32.mrf.mxu0
      %v1143 = vadd.f32 0.0, %v1142
      %v1144 = vpop.f32.mrf.mxu0
      %1145 = vmatprep.mubr.f32.mxu0 %v853
      %1146 = vmatmul.mubr.f32.gmra.mxu0 %v852
      %v1147 = vpop.f32.mrf.mxu0
      %v1148 = vadd.f32 0.0, %v1147
      %v1149 = vpop.f32.mrf.mxu0
      %1150 = vmatprep.mubr.f32.mxu0 %v861
      %1151 = vmatmul.mubr.f32.gmra.mxu0 %v860
      %v1152 = vpop.f32.mrf.mxu0
      %v1153 = vadd.f32 0.0, %v1152
      %v1154 = vpop.f32.mrf.mxu0
      %1155 = vmatprep.mubr.f32.mxu0 %v869
      %1156 = vmatmul.mubr.f32.gmra.mxu0 %v868
      %v1157 = vpop.f32.mrf.mxu0
      %v1158 = vadd.f32 0.0, %v1157
      %v1159 = vpop.f32.mrf.mxu0
      %1160 = vmatprep.mubr.f32.mxu0 %v877
      %1161 = vmatmul.mubr.f32.gmra.mxu0 %v876
      %v1162 = vpop.f32.mrf.mxu0
      %v1163 = vadd.f32 0.0, %v1162
      %v1164 = vpop.f32.mrf.mxu0
      %1165 = vmatprep.mubr.f32.mxu0 %v885
      %1166 = vmatmul.mubr.f32.gmra.mxu0 %v884
      %v1167 = vpop.f32.mrf.mxu0
      %v1168 = vadd.f32 0.0, %v1167
      %v1169 = vpop.f32.mrf.mxu0
      %1170 = vmatprep.mubr.f32.mxu0 %v893
      %1171 = vmatmul.mubr.f32.gmra.mxu0 %v892
      %v1172 = vpop.f32.mrf.mxu0
      %v1173 = vadd.f32 0.0, %v1172
      %v1174 = vpop.f32.mrf.mxu0
      %1175 = vmatprep.mubr.f32.mxu0 %v901
      %1176 = vmatmul.mubr.f32.gmra.mxu0 %v900
      %v1177 = vpop.f32.mrf.mxu0
      %v1178 = vadd.f32 0.0, %v1177
      %v1179 = vpop.f32.mrf.mxu0
      %1180 = vdwg.mxu0
      %1181 = vmatprep.subr.mxu0 0.0
      %1182 = vmatpush1.msra.mxu0 %v955
      %1183 = vmatprep.subr.mxu0 0.0
      %1184 = vmatpush1.msra.mxu0 %v954
      %1185 = vmatprep.subr.mxu0 0.0
      %1186 = vmatpush1.msra.mxu0 %v953
      %1187 = vmatprep.subr.mxu0 0.0
      %1188 = vmatpush1.msra.mxu0 %v952
      %1189 = vmatprep.subr.mxu0 0.0
      %1190 = vmatpush1.msra.mxu0 %v951
      %1191 = vmatprep.subr.mxu0 0.0
      %1192 = vmatpush1.msra.mxu0 %v950
      %1193 = vmatprep.subr.mxu0 0.0
      %1194 = vmatpush1.msra.mxu0 %v949
      %1195 = vmatprep.subr.mxu0 0.0
      %1196 = vmatpush1.msra.mxu0 %v948
      %1197 = vmatprep.subr.mxu0 0.0
      %1198 = vmatpush1.msra.mxu0 %v947
      %1199 = vmatprep.subr.mxu0 0.0
      %1200 = vmatpush1.msra.mxu0 %v946
      %1201 = vmatprep.subr.mxu0 0.0
      %1202 = vmatpush1.msra.mxu0 %v945
      %1203 = vmatprep.subr.mxu0 0.0
      %1204 = vmatpush1.msra.mxu0 %v944
      %1205 = vmatprep.subr.mxu0 0.0
      %1206 = vmatpush1.msra.mxu0 %v943
      %1207 = vmatprep.subr.mxu0 0.0
      %1208 = vmatpush1.msra.mxu0 %v942
      %1209 = vmatprep.subr.mxu0 0.0
      %1210 = vmatpush1.msra.mxu0 %v941
      %1211 = vmatprep.subr.mxu0 0.0
      %1212 = vmatpush1.msra.mxu0 %v940
      %1213 = vmatprep.subr.mxu0 0.0
      %1214 = vmatpush2.msra.mxu0 %v971
      %1215 = vmatprep.subr.mxu0 0.0
      %1216 = vmatpush2.msra.mxu0 %v970
      %1217 = vmatprep.subr.mxu0 0.0
      %1218 = vmatpush2.msra.mxu0 %v969
      %1219 = vmatprep.subr.mxu0 0.0
      %1220 = vmatpush2.msra.mxu0 %v968
      %1221 = vmatprep.subr.mxu0 0.0
      %1222 = vmatpush2.msra.mxu0 %v967
      %1223 = vmatprep.subr.mxu0 0.0
      %1224 = vmatpush2.msra.mxu0 %v966
      %1225 = vmatprep.subr.mxu0 0.0
      %1226 = vmatpush2.msra.mxu0 %v965
      %1227 = vmatprep.subr.mxu0 0.0
      %1228 = vmatpush2.msra.mxu0 %v964
      %1229 = vmatprep.subr.mxu0 0.0
      %1230 = vmatpush2.msra.mxu0 %v963
      %1231 = vmatprep.subr.mxu0 0.0
      %1232 = vmatpush2.msra.mxu0 %v962
      %1233 = vmatprep.subr.mxu0 0.0
      %1234 = vmatpush2.msra.mxu0 %v961
      %1235 = vmatprep.subr.mxu0 0.0
      %1236 = vmatpush2.msra.mxu0 %v960
      %1237 = vmatprep.subr.mxu0 0.0
      %1238 = vmatpush2.msra.mxu0 %v959
      %1239 = vmatprep.subr.mxu0 0.0
      %1240 = vmatpush2.msra.mxu0 %v958
      %1241 = vmatprep.subr.mxu0 0.0
      %1242 = vmatpush2.msra.mxu0 %v957
      %1243 = vmatprep.subr.mxu0 0.0
      %1244 = vmatpush2.msra.mxu0 %v956
      %1245 = vmatprep.mubr.f32.mxu0 %v783
      %1246 = vmatmul.mubr.f32.gmra.mxu0 %v782
      %v1247 = vpop.f32.mrf.mxu0
      %v1248 = vadd.f32 %v1103, %v1247
      %v1249 = vpop.f32.mrf.mxu0
      %1250 = vmatprep.mubr.f32.mxu0 %v791
      %1251 = vmatmul.mubr.f32.gmra.mxu0 %v790
      %v1252 = vpop.f32.mrf.mxu0
      %v1253 = vadd.f32 %v1108, %v1252
      %v1254 = vpop.f32.mrf.mxu0
      %1255 = vmatprep.mubr.f32.mxu0 %v799
      %1256 = vmatmul.mubr.f32.gmra.mxu0 %v798
      %v1257 = vpop.f32.mrf.mxu0
      %v1258 = vadd.f32 %v1113, %v1257
      %v1259 = vpop.f32.mrf.mxu0
      %1260 = vmatprep.mubr.f32.mxu0 %v807
      %1261 = vmatmul.mubr.f32.gmra.mxu0 %v806
      %v1262 = vpop.f32.mrf.mxu0
      %v1263 = vadd.f32 %v1118, %v1262
      %v1264 = vpop.f32.mrf.mxu0
      %1265 = vmatprep.mubr.f32.mxu0 %v815
      %1266 = vmatmul.mubr.f32.gmra.mxu0 %v814
      %v1267 = vpop.f32.mrf.mxu0
      %v1268 = vadd.f32 %v1123, %v1267
      %v1269 = vpop.f32.mrf.mxu0
      %1270 = vmatprep.mubr.f32.mxu0 %v823
      %1271 = vmatmul.mubr.f32.gmra.mxu0 %v822
      %v1272 = vpop.f32.mrf.mxu0
      %v1273 = vadd.f32 %v1128, %v1272
      %v1274 = vpop.f32.mrf.mxu0
      %1275 = vmatprep.mubr.f32.mxu0 %v831
      %1276 = vmatmul.mubr.f32.gmra.mxu0 %v830
      %v1277 = vpop.f32.mrf.mxu0
      %v1278 = vadd.f32 %v1133, %v1277
      %v1279 = vpop.f32.mrf.mxu0
      %1280 = vmatprep.mubr.f32.mxu0 %v839
      %1281 = vmatmul.mubr.f32.gmra.mxu0 %v838
      %v1282 = vpop.f32.mrf.mxu0
      %v1283 = vadd.f32 %v1138, %v1282
      %v1284 = vpop.f32.mrf.mxu0
      %1285 = vmatprep.mubr.f32.mxu0 %v847
      %1286 = vmatmul.mubr.f32.gmra.mxu0 %v846
      %v1287 = vpop.f32.mrf.mxu0
      %v1288 = vadd.f32 %v1143, %v1287
      %v1289 = vpop.f32.mrf.mxu0
      %1290 = vmatprep.mubr.f32.mxu0 %v855
      %1291 = vmatmul.mubr.f32.gmra.mxu0 %v854
      %v1292 = vpop.f32.mrf.mxu0
      %v1293 = vadd.f32 %v1148, %v1292
      %v1294 = vpop.f32.mrf.mxu0
      %1295 = vmatprep.mubr.f32.mxu0 %v863
      %1296 = vmatmul.mubr.f32.gmra.mxu0 %v862
      %v1297 = vpop.f32.mrf.mxu0
      %v1298 = vadd.f32 %v1153, %v1297
      %v1299 = vpop.f32.mrf.mxu0
      %1300 = vmatprep.mubr.f32.mxu0 %v871
      %1301 = vmatmul.mubr.f32.gmra.mxu0 %v870
      %v1302 = vpop.f32.mrf.mxu0
      %v1303 = vadd.f32 %v1158, %v1302
      %v1304 = vpop.f32.mrf.mxu0
      %1305 = vmatprep.mubr.f32.mxu0 %v879
      %1306 = vmatmul.mubr.f32.gmra.mxu0 %v878
      %v1307 = vpop.f32.mrf.mxu0
      %v1308 = vadd.f32 %v1163, %v1307
      %v1309 = vpop.f32.mrf.mxu0
      %1310 = vmatprep.mubr.f32.mxu0 %v887
      %1311 = vmatmul.mubr.f32.gmra.mxu0 %v886
      %v1312 = vpop.f32.mrf.mxu0
      %v1313 = vadd.f32 %v1168, %v1312
      %v1314 = vpop.f32.mrf.mxu0
      %1315 = vmatprep.mubr.f32.mxu0 %v895
      %1316 = vmatmul.mubr.f32.gmra.mxu0 %v894
      %v1317 = vpop.f32.mrf.mxu0
      %v1318 = vadd.f32 %v1173, %v1317
      %v1319 = vpop.f32.mrf.mxu0
      %1320 = vmatprep.mubr.f32.mxu0 %v903
      %1321 = vmatmul.mubr.f32.gmra.mxu0 %v902
      %v1322 = vpop.f32.mrf.mxu0
      %v1323 = vadd.f32 %v1178, %v1322
      %v1324 = vpop.f32.mrf.mxu0
      %1325 = vdwg.mxu0
      %1326 = vmatprep.subr.mxu0 0.0
      %1327 = vmatpush1.msra.mxu0 %v987
      %1328 = vmatprep.subr.mxu0 0.0
      %1329 = vmatpush1.msra.mxu0 %v986
      %1330 = vmatprep.subr.mxu0 0.0
      %1331 = vmatpush1.msra.mxu0 %v985
      %1332 = vmatprep.subr.mxu0 0.0
      %1333 = vmatpush1.msra.mxu0 %v984
      %1334 = vmatprep.subr.mxu0 0.0
      %1335 = vmatpush1.msra.mxu0 %v983
      %1336 = vmatprep.subr.mxu0 0.0
      %1337 = vmatpush1.msra.mxu0 %v982
      %1338 = vmatprep.subr.mxu0 0.0
      %1339 = vmatpush1.msra.mxu0 %v981
      %1340 = vmatprep.subr.mxu0 0.0
      %1341 = vmatpush1.msra.mxu0 %v980
      %1342 = vmatprep.subr.mxu0 0.0
      %1343 = vmatpush1.msra.mxu0 %v979
      %1344 = vmatprep.subr.mxu0 0.0
      %1345 = vmatpush1.msra.mxu0 %v978
      %1346 = vmatprep.subr.mxu0 0.0
      %1347 = vmatpush1.msra.mxu0 %v977
      %1348 = vmatprep.subr.mxu0 0.0
      %1349 = vmatpush1.msra.mxu0 %v976
      %1350 = vmatprep.subr.mxu0 0.0
      %1351 = vmatpush1.msra.mxu0 %v975
      %1352 = vmatprep.subr.mxu0 0.0
      %1353 = vmatpush1.msra.mxu0 %v974
      %1354 = vmatprep.subr.mxu0 0.0
      %1355 = vmatpush1.msra.mxu0 %v973
      %1356 = vmatprep.subr.mxu0 0.0
      %1357 = vmatpush1.msra.mxu0 %v972
      %1358 = vmatprep.subr.mxu0 0.0
      %1359 = vmatpush2.msra.mxu0 %v1003
      %1360 = vmatprep.subr.mxu0 0.0
      %1361 = vmatpush2.msra.mxu0 %v1002
      %1362 = vmatprep.subr.mxu0 0.0
      %1363 = vmatpush2.msra.mxu0 %v1001
      %1364 = vmatprep.subr.mxu0 0.0
      %1365 = vmatpush2.msra.mxu0 %v1000
      %1366 = vmatprep.subr.mxu0 0.0
      %1367 = vmatpush2.msra.mxu0 %v999
      %1368 = vmatprep.subr.mxu0 0.0
      %1369 = vmatpush2.msra.mxu0 %v998
      %1370 = vmatprep.subr.mxu0 0.0
      %1371 = vmatpush2.msra.mxu0 %v997
      %1372 = vmatprep.subr.mxu0 0.0
      %1373 = vmatpush2.msra.mxu0 %v996
      %1374 = vmatprep.subr.mxu0 0.0
      %1375 = vmatpush2.msra.mxu0 %v995
      %1376 = vmatprep.subr.mxu0 0.0
      %1377 = vmatpush2.msra.mxu0 %v994
      %1378 = vmatprep.subr.mxu0 0.0
      %1379 = vmatpush2.msra.mxu0 %v993
      %1380 = vmatprep.subr.mxu0 0.0
      %1381 = vmatpush2.msra.mxu0 %v992
      %1382 = vmatprep.subr.mxu0 0.0
      %1383 = vmatpush2.msra.mxu0 %v991
      %1384 = vmatprep.subr.mxu0 0.0
      %1385 = vmatpush2.msra.mxu0 %v990
      %1386 = vmatprep.subr.mxu0 0.0
      %1387 = vmatpush2.msra.mxu0 %v989
      %1388 = vmatprep.subr.mxu0 0.0
      %1389 = vmatpush2.msra.mxu0 %v988
      %1390 = vmatprep.mubr.f32.mxu0 %v785
      %1391 = vmatmul.mubr.f32.gmra.mxu0 %v784
      %v1392 = vpop.f32.mrf.mxu0
      %v1393 = vadd.f32 %v1248, %v1392
      %v1394 = vpop.f32.mrf.mxu0
      %1395 = vmatprep.mubr.f32.mxu0 %v793
      %1396 = vmatmul.mubr.f32.gmra.mxu0 %v792
      %v1397 = vpop.f32.mrf.mxu0
      %v1398 = vadd.f32 %v1253, %v1397
      %v1399 = vpop.f32.mrf.mxu0
      %1400 = vmatprep.mubr.f32.mxu0 %v801
      %1401 = vmatmul.mubr.f32.gmra.mxu0 %v800
      %v1402 = vpop.f32.mrf.mxu0
      %v1403 = vadd.f32 %v1258, %v1402
      %v1404 = vpop.f32.mrf.mxu0
      %1405 = vmatprep.mubr.f32.mxu0 %v809
      %1406 = vmatmul.mubr.f32.gmra.mxu0 %v808
      %v1407 = vpop.f32.mrf.mxu0
      %v1408 = vadd.f32 %v1263, %v1407
      %v1409 = vpop.f32.mrf.mxu0
      %1410 = vmatprep.mubr.f32.mxu0 %v817
      %1411 = vmatmul.mubr.f32.gmra.mxu0 %v816
      %v1412 = vpop.f32.mrf.mxu0
      %v1413 = vadd.f32 %v1268, %v1412
      %v1414 = vpop.f32.mrf.mxu0
      %1415 = vmatprep.mubr.f32.mxu0 %v825
      %1416 = vmatmul.mubr.f32.gmra.mxu0 %v824
      %v1417 = vpop.f32.mrf.mxu0
      %v1418 = vadd.f32 %v1273, %v1417
      %v1419 = vpop.f32.mrf.mxu0
      %1420 = vmatprep.mubr.f32.mxu0 %v833
      %1421 = vmatmul.mubr.f32.gmra.mxu0 %v832
      %v1422 = vpop.f32.mrf.mxu0
      %v1423 = vadd.f32 %v1278, %v1422
      %v1424 = vpop.f32.mrf.mxu0
      %1425 = vmatprep.mubr.f32.mxu0 %v841
      %1426 = vmatmul.mubr.f32.gmra.mxu0 %v840
      %v1427 = vpop.f32.mrf.mxu0
      %v1428 = vadd.f32 %v1283, %v1427
      %v1429 = vpop.f32.mrf.mxu0
      %1430 = vmatprep.mubr.f32.mxu0 %v849
      %1431 = vmatmul.mubr.f32.gmra.mxu0 %v848
      %v1432 = vpop.f32.mrf.mxu0
      %v1433 = vadd.f32 %v1288, %v1432
      %v1434 = vpop.f32.mrf.mxu0
      %1435 = vmatprep.mubr.f32.mxu0 %v857
      %1436 = vmatmul.mubr.f32.gmra.mxu0 %v856
      %v1437 = vpop.f32.mrf.mxu0
      %v1438 = vadd.f32 %v1293, %v1437
      %v1439 = vpop.f32.mrf.mxu0
      %1440 = vmatprep.mubr.f32.mxu0 %v865
      %1441 = vmatmul.mubr.f32.gmra.mxu0 %v864
      %v1442 = vpop.f32.mrf.mxu0
      %v1443 = vadd.f32 %v1298, %v1442
      %v1444 = vpop.f32.mrf.mxu0
      %1445 = vmatprep.mubr.f32.mxu0 %v873
      %1446 = vmatmul.mubr.f32.gmra.mxu0 %v872
      %v1447 = vpop.f32.mrf.mxu0
      %v1448 = vadd.f32 %v1303, %v1447
      %v1449 = vpop.f32.mrf.mxu0
      %1450 = vmatprep.mubr.f32.mxu0 %v881
      %1451 = vmatmul.mubr.f32.gmra.mxu0 %v880
      %v1452 = vpop.f32.mrf.mxu0
      %v1453 = vadd.f32 %v1308, %v1452
      %v1454 = vpop.f32.mrf.mxu0
      %1455 = vmatprep.mubr.f32.mxu0 %v889
      %1456 = vmatmul.mubr.f32.gmra.mxu0 %v888
      %v1457 = vpop.f32.mrf.mxu0
      %v1458 = vadd.f32 %v1313, %v1457
      %v1459 = vpop.f32.mrf.mxu0
      %1460 = vmatprep.mubr.f32.mxu0 %v897
      %1461 = vmatmul.mubr.f32.gmra.mxu0 %v896
      %v1462 = vpop.f32.mrf.mxu0
      %v1463 = vadd.f32 %v1318, %v1462
      %v1464 = vpop.f32.mrf.mxu0
      %1465 = vmatprep.mubr.f32.mxu0 %v905
      %1466 = vmatmul.mubr.f32.gmra.mxu0 %v904
      %v1467 = vpop.f32.mrf.mxu0
      %v1468 = vadd.f32 %v1323, %v1467
      %v1469 = vpop.f32.mrf.mxu0
      %1470 = vdwg.mxu0
      %1471 = vmatprep.subr.mxu0 0.0
      %1472 = vmatpush1.msra.mxu0 %v1019
      %1473 = vmatprep.subr.mxu0 0.0
      %1474 = vmatpush1.msra.mxu0 %v1018
      %1475 = vmatprep.subr.mxu0 0.0
      %1476 = vmatpush1.msra.mxu0 %v1017
      %1477 = vmatprep.subr.mxu0 0.0
      %1478 = vmatpush1.msra.mxu0 %v1016
      %1479 = vmatprep.subr.mxu0 0.0
      %1480 = vmatpush1.msra.mxu0 %v1015
      %1481 = vmatprep.subr.mxu0 0.0
      %1482 = vmatpush1.msra.mxu0 %v1014
      %1483 = vmatprep.subr.mxu0 0.0
      %1484 = vmatpush1.msra.mxu0 %v1013
      %1485 = vmatprep.subr.mxu0 0.0
      %1486 = vmatpush1.msra.mxu0 %v1012
      %1487 = vmatprep.subr.mxu0 0.0
      %1488 = vmatpush1.msra.mxu0 %v1011
      %1489 = vmatprep.subr.mxu0 0.0
      %1490 = vmatpush1.msra.mxu0 %v1010
      %1491 = vmatprep.subr.mxu0 0.0
      %1492 = vmatpush1.msra.mxu0 %v1009
      %1493 = vmatprep.subr.mxu0 0.0
      %1494 = vmatpush1.msra.mxu0 %v1008
      %1495 = vmatprep.subr.mxu0 0.0
      %1496 = vmatpush1.msra.mxu0 %v1007
      %1497 = vmatprep.subr.mxu0 0.0
      %1498 = vmatpush1.msra.mxu0 %v1006
      %1499 = vmatprep.subr.mxu0 0.0
      %1500 = vmatpush1.msra.mxu0 %v1005
      %1501 = vmatprep.subr.mxu0 0.0
      %1502 = vmatpush1.msra.mxu0 %v1004
      %1503 = vmatprep.subr.mxu0 0.0
      %1504 = vmatpush2.msra.mxu0 %v1035
      %1505 = vmatprep.subr.mxu0 0.0
      %1506 = vmatpush2.msra.mxu0 %v1034
      %1507 = vmatprep.subr.mxu0 0.0
      %1508 = vmatpush2.msra.mxu0 %v1033
      %1509 = vmatprep.subr.mxu0 0.0
      %1510 = vmatpush2.msra.mxu0 %v1032
      %1511 = vmatprep.subr.mxu0 0.0
      %1512 = vmatpush2.msra.mxu0 %v1031
      %1513 = vmatprep.subr.mxu0 0.0
      %1514 = vmatpush2.msra.mxu0 %v1030
      %1515 = vmatprep.subr.mxu0 0.0
      %1516 = vmatpush2.msra.mxu0 %v1029
      %1517 = vmatprep.subr.mxu0 0.0
      %1518 = vmatpush2.msra.mxu0 %v1028
      %1519 = vmatprep.subr.mxu0 0.0
      %1520 = vmatpush2.msra.mxu0 %v1027
      %1521 = vmatprep.subr.mxu0 0.0
      %1522 = vmatpush2.msra.mxu0 %v1026
      %1523 = vmatprep.subr.mxu0 0.0
      %1524 = vmatpush2.msra.mxu0 %v1025
      %1525 = vmatprep.subr.mxu0 0.0
      %1526 = vmatpush2.msra.mxu0 %v1024
      %1527 = vmatprep.subr.mxu0 0.0
      %1528 = vmatpush2.msra.mxu0 %v1023
      %1529 = vmatprep.subr.mxu0 0.0
      %1530 = vmatpush2.msra.mxu0 %v1022
      %1531 = vmatprep.subr.mxu0 0.0
      %1532 = vmatpush2.msra.mxu0 %v1021
      %1533 = vmatprep.subr.mxu0 0.0
      %1534 = vmatpush2.msra.mxu0 %v1020
      %1535 = vmatprep.mubr.f32.mxu0 %v787
      %1536 = vmatmul.mubr.f32.gmra.mxu0 %v786
      %v1537 = vpop.f32.mrf.mxu0
      %v1538 = vadd.f32 %v1393, %v1537
      %v1539 = vpop.f32.mrf.mxu0
      %1540 = vmatprep.mubr.f32.mxu0 %v795
      %1541 = vmatmul.mubr.f32.gmra.mxu0 %v794
      %v1542 = vpop.f32.mrf.mxu0
      %v1543 = vadd.f32 %v1398, %v1542
      %v1544 = vpop.f32.mrf.mxu0
      %1545 = vmatprep.mubr.f32.mxu0 %v803
      %1546 = vmatmul.mubr.f32.gmra.mxu0 %v802
      %v1547 = vpop.f32.mrf.mxu0
      %v1548 = vadd.f32 %v1403, %v1547
      %v1549 = vpop.f32.mrf.mxu0
      %1550 = vmatprep.mubr.f32.mxu0 %v811
      %1551 = vmatmul.mubr.f32.gmra.mxu0 %v810
      %v1552 = vpop.f32.mrf.mxu0
      %v1553 = vadd.f32 %v1408, %v1552
      %v1554 = vpop.f32.mrf.mxu0
      %1555 = vmatprep.mubr.f32.mxu0 %v819
      %1556 = vmatmul.mubr.f32.gmra.mxu0 %v818
      %v1557 = vpop.f32.mrf.mxu0
      %v1558 = vadd.f32 %v1413, %v1557
      %v1559 = vpop.f32.mrf.mxu0
      %1560 = vmatprep.mubr.f32.mxu0 %v827
      %1561 = vmatmul.mubr.f32.gmra.mxu0 %v826
      %v1562 = vpop.f32.mrf.mxu0
      %v1563 = vadd.f32 %v1418, %v1562
      %v1564 = vpop.f32.mrf.mxu0
      %1565 = vmatprep.mubr.f32.mxu0 %v835
      %1566 = vmatmul.mubr.f32.gmra.mxu0 %v834
      %v1567 = vpop.f32.mrf.mxu0
      %v1568 = vadd.f32 %v1423, %v1567
      %v1569 = vpop.f32.mrf.mxu0
      %1570 = vmatprep.mubr.f32.mxu0 %v843
      %1571 = vmatmul.mubr.f32.gmra.mxu0 %v842
      %v1572 = vpop.f32.mrf.mxu0
      %v1573 = vadd.f32 %v1428, %v1572
      %v1574 = vpop.f32.mrf.mxu0
      %1575 = vmatprep.mubr.f32.mxu0 %v851
      %1576 = vmatmul.mubr.f32.gmra.mxu0 %v850
      %v1577 = vpop.f32.mrf.mxu0
      %v1578 = vadd.f32 %v1433, %v1577
      %v1579 = vpop.f32.mrf.mxu0
      %1580 = vmatprep.mubr.f32.mxu0 %v859
      %1581 = vmatmul.mubr.f32.gmra.mxu0 %v858
      %v1582 = vpop.f32.mrf.mxu0
      %v1583 = vadd.f32 %v1438, %v1582
      %v1584 = vpop.f32.mrf.mxu0
      %1585 = vmatprep.mubr.f32.mxu0 %v867
      %1586 = vmatmul.mubr.f32.gmra.mxu0 %v866
      %v1587 = vpop.f32.mrf.mxu0
      %v1588 = vadd.f32 %v1443, %v1587
      %v1589 = vpop.f32.mrf.mxu0
      %1590 = vmatprep.mubr.f32.mxu0 %v875
      %1591 = vmatmul.mubr.f32.gmra.mxu0 %v874
      %v1592 = vpop.f32.mrf.mxu0
      %v1593 = vadd.f32 %v1448, %v1592
      %v1594 = vpop.f32.mrf.mxu0
      %1595 = vmatprep.mubr.f32.mxu0 %v883
      %1596 = vmatmul.mubr.f32.gmra.mxu0 %v882
      %v1597 = vpop.f32.mrf.mxu0
      %v1598 = vadd.f32 %v1453, %v1597
      %v1599 = vpop.f32.mrf.mxu0
      %1600 = vmatprep.mubr.f32.mxu0 %v891
      %1601 = vmatmul.mubr.f32.gmra.mxu0 %v890
      %v1602 = vpop.f32.mrf.mxu0
      %v1603 = vadd.f32 %v1458, %v1602
      %v1604 = vpop.f32.mrf.mxu0
      %1605 = vmatprep.mubr.f32.mxu0 %v899
      %1606 = vmatmul.mubr.f32.gmra.mxu0 %v898
      %v1607 = vpop.f32.mrf.mxu0
      %v1608 = vadd.f32 %v1463, %v1607
      %v1609 = vpop.f32.mrf.mxu0
      %1610 = vmatprep.mubr.f32.mxu0 %v907
      %1611 = vmatmul.mubr.f32.gmra.mxu0 %v906
      %v1612 = vpop.f32.mrf.mxu0
      %v1613 = vadd.f32 %v1468, %v1612
      %v1614 = vpop.f32.mrf.mxu0
      %1615 = vdwg.mxu0
      %1616 = vst [vmem:[%s145] sm:$0xff] %v1538
      %1617 = vst [vmem:[%s145 + $0x8] sm:$0xff] %v1543
      %1618 = vst [vmem:[%s145 + $0x10] sm:$0xff] %v1548
      %1619 = vst [vmem:[%s145 + $0x18] sm:$0xff] %v1553
      %1620 = vst [vmem:[%s145 + $0x20] sm:$0xff] %v1558
      %1621 = vst [vmem:[%s145 + $0x28] sm:$0xff] %v1563
      %1622 = vst [vmem:[%s145 + $0x30] sm:$0xff] %v1568
      %1623 = vst [vmem:[%s145 + $0x38] sm:$0xff] %v1573
      %1624 = vst [vmem:[%s145 + $0x40] sm:$0xff] %v1578
      %1625 = vst [vmem:[%s145 + $0x48] sm:$0xff] %v1583
      %1626 = vst [vmem:[%s145 + $0x50] sm:$0xff] %v1588
      %1627 = vst [vmem:[%s145 + $0x58] sm:$0xff] %v1593
      %1628 = vst [vmem:[%s145 + $0x60] sm:$0xff] %v1598
      %1629 = vst [vmem:[%s145 + $0x68] sm:$0xff] %v1603
      %1630 = vst [vmem:[%s145 + $0x70] sm:$0xff] %v1608
      %1631 = vst [vmem:[%s145 + $0x78] sm:$0xff] %v1613
      %s1632 = smul.u32 16, %s13
      %p1633 = scmp.lt.s32.totalorder %s1632, 31
      %s1634 = scalar_select %p1633, %s1632, 31
      %s1635 = smul.addr %s1634, 8
      %s1636 = scalar_lea.vmem %s2, %s1635
      // Predicated region
      $region29: #{_embedding_lookup_pallas.1} parent=27 // pred_check
        %p1637 = pneg %p78
      $region30: #{_embedding_lookup_pallas.1} parent=27 // pred_check_branch
        %1639 = sbr.rel (%p1637) target = $region32
      $region31: #{_embedding_lookup_pallas.1} parent=27 // pred_region
        %s1640 = smul.u32 16, %s13
      $region32: #{_embedding_lookup_pallas.1} parent=27 // pred_fallthru
        _
    $region28: #{_embedding_lookup_pallas.1} parent=5 // pred_fallthru
      _
    %p1641 = scmp.le.s32.totalorder 2, %s8
    // Predicated region
    $region33: #{_embedding_lookup_pallas.1} parent=5 // pred_check
      %p1642 = pneg %p1641
    $region34: #{_embedding_lookup_pallas.1} parent=5 // pred_check_branch
      %1644 = sbr.rel (%p1642) target = $region36
    $region35: #{_embedding_lookup_pallas.1} parent=5 // pred_region
      %s1645 = ssub.s32 %s8, 2
      // Predicated region
      $region37: #{_embedding_lookup_pallas.1} parent=35 // pred_check
        %p1646 = pneg %p84
      $region38: #{_embedding_lookup_pallas.1} parent=35 // pred_check_branch
        %1648 = sbr.rel (%p1646) target = $region40
      $region39: #{_embedding_lookup_pallas.1} parent=35 // pred_region
        %s1649 = smul.u32 16, %s14
        %p1650 = scmp.lt.s32.totalorder %s1649, 31
        %s1651 = scalar_select %p1650, %s1649, 31
        %s1652 = smul.addr %s1651, 8
        %s1653 = scalar_lea.vmem %s2, %s1652
      $region40: #{_embedding_lookup_pallas.1} parent=35 // pred_fallthru
        _
    $region36: #{_embedding_lookup_pallas.1} parent=5 // pred_fallthru
      _
  $region6: #{_embedding_lookup_pallas.1} parent=0 // loop_footer
    %s12 = sadd.s32 1, %s8
  $region7: #{_embedding_lookup_pallas.1} parent=0 // loop_footer_branch
    %7 = sbr.rel target = $region3
  $region8: #{_embedding_lookup_pallas.1} parent=0 // loop_exit
    _

</llo_original>
